<compile_context>
chip_gen: v6e
topology: v6e:2x2x1
jax: 0.10.0
libtpu: 0.0.40
codegen_flags: <defaults>
</compile_context>

<pallas_src>
import functools

import jax
import jax.numpy as jnp
import numpy as np
from jax.experimental import pallas as pl
from jax.experimental.pallas import tpu as pltpu

LANE = 128     # lane-dense output width
TILE_M = 128   # patch-row tile (parallel grid axis)

# Robust across jax versions (older releases call it TPUCompilerParams).
_CompilerParams = getattr(pltpu, "CompilerParams", None) or getattr(
    pltpu, "TPUCompilerParams", None)


# ----------------------------------------------------------------------------
# Pallas kernel: fused (patches @ weight) + bias + activation (MXU + VPU/EUP)
# ----------------------------------------------------------------------------
def _mm_bias_act_kernel(x_ref, w_ref, b_ref, o_ref, *, activation):
    acc = jnp.dot(x_ref[...], w_ref[...], preferred_element_type=jnp.float32)
    acc = acc + b_ref[...]                      # (1, N) broadcast vs (M, N)
    if activation == "relu":
        acc = jnp.maximum(acc, 0.0)
    elif activation == "tanh":
        acc = jnp.tanh(acc)
    o_ref[...] = acc.astype(o_ref.dtype)


def matmul_bias_act(patches, w, b, activation):
    """(M, K) @ (K, N) + b, activation.  Output padded to 128 lanes in-kernel,
    M tiled in 128-row parallel blocks; padding sliced off afterwards."""
    M, K = patches.shape
    Kw, N = w.shape
    assert K == Kw and b.shape == (N,)
    n_pad = LANE * pl.cdiv(N, LANE)
    m_pad = TILE_M * pl.cdiv(M, TILE_M)
    xp = jnp.pad(patches, ((0, m_pad - M), (0, 0)))
    wp = jnp.pad(w, ((0, 0), (0, n_pad - N)))
    bp = jnp.pad(b, (0, n_pad - N)).reshape(1, n_pad)

    kernel = functools.partial(_mm_bias_act_kernel, activation=activation)
    extra = {}
    if _CompilerParams is not None:
        extra["compiler_params"] = _CompilerParams(
            dimension_semantics=("parallel",))
    if hasattr(pl, "CostEstimate"):
        extra["cost_estimate"] = pl.CostEstimate(
            flops=2 * m_pad * K * n_pad,
            transcendentals=(m_pad * n_pad if activation == "tanh" else 0),
            bytes_accessed=4 * (m_pad * K + K * n_pad + n_pad + m_pad * n_pad),
        )

    out = pl.pallas_call(
        kernel,
        out_shape=jax.ShapeDtypeStruct((m_pad, n_pad), jnp.float32),
        grid=(m_pad // TILE_M,),
        in_specs=[
            pl.BlockSpec((TILE_M, K), lambda i: (i, 0)),
            pl.BlockSpec((K, n_pad), lambda i: (0, 0)),
            pl.BlockSpec((1, n_pad), lambda i: (0, 0)),
        ],
        out_specs=pl.BlockSpec((TILE_M, n_pad), lambda i: (i, 0)),
        **extra,
    )(xp, wp, bp)
    return out[:M, :N]


# ----------------------------------------------------------------------------
# Layers (XLA glue builds patches; every GEMM is the Pallas kernel above)
# ----------------------------------------------------------------------------
def conv2d(x, w_hwio, b, stride, padding, activation):
    """x: NHWC, w_hwio: (kh, kw, Cin, Cout)."""
    N, H, W, Cin = x.shape
    kh, kw, _, Cout = w_hwio.shape
    xp = jnp.pad(x, ((0, 0), (padding, padding), (padding, padding), (0, 0)))
    Ho = (H + 2 * padding - kh) // stride + 1
    Wo = (W + 2 * padding - kw) // stride + 1
    cols = []
    for dy in range(kh):
        for dx in range(kw):
            cols.append(
                xp[:, dy: dy + stride * Ho: stride, dx: dx + stride * Wo: stride, :])
    patches = jnp.stack(cols, axis=3).reshape(N * Ho * Wo, kh * kw * Cin)
    w2 = w_hwio.reshape(kh * kw * Cin, Cout)
    out = matmul_bias_act(patches, w2, b, activation)
    return out.reshape(N, Ho, Wo, Cout)


def maxpool2x2(x, stride):
    """MaxPool2d(2) as an XLA max over 4 shifted views (fused into the glue
    that feeds the next conv's patch construction; no separate kernel)."""
    N, H, W, C = x.shape
    Ho = (H - 2) // stride + 1
    Wo = (W - 2) // stride + 1
    out = None
    for dy in range(2):
        for dx in range(2):
            v = x[:, dy: dy + stride * (Ho - 1) + 1: stride,
                     dx: dx + stride * (Wo - 1) + 1: stride, :]
            out = v if out is None else jnp.maximum(out, v)
    return out


def conv_transpose2d(x, w_torch, b, stride, padding, activation):
    """ConvTranspose2d (stride=2) via output-phase decomposition.

    Per spatial dim:  out[y] = sum_i x[i] * W[y + p - 2 i]
                            = sum_a x[m - a] * W[2 a + q],
    with m = (y+p)//2, q = (y+p)%2.  All 4 (q_y, q_x) phases share one patch
    matrix built from the UN-dilated input; their weights are stacked along
    the GEMM output axis (lane width 4*Cout), then interleaved + cropped.
    w_torch: PyTorch layout (Cin, Cout, kh, kw)."""
    assert stride == 2
    N, Hi, Wi, Cin = x.shape
    Cin_w, Cout, kh, kw = w_torch.shape
    assert Cin_w == Cin and kh == kw
    k, p = kh, padding
    Ho = (Hi - 1) * 2 - 2 * p + k
    Wo = (Wi - 1) * 2 - 2 * p + k
    T = (k + 1) // 2                      # taps per dim per phase window
    m_max_y = (Ho - 1 + p) // 2
    m_max_x = (Wo - 1 + p) // 2
    My, Mx = m_max_y + 1, m_max_x + 1
    ry = max(0, m_max_y - (Hi - 1))
    rx = max(0, m_max_x - (Wi - 1))
    xp = jnp.pad(x, ((0, 0), (T - 1, ry), (T - 1, rx), (0, 0)))

    # Unified patches: entry (a_y, a_x) of window at (m_y, m_x) reads x[m - a].
    cols = []
    for a_y in range(T):
        for a_x in range(T):
            sy, sx = T - 1 - a_y, T - 1 - a_x
            cols.append(xp[:, sy: sy + My, sx: sx + Mx, :])
    patches = jnp.stack(cols, axis=3).reshape(N * My * Mx, T * T * Cin)

    # Per-phase sub-kernels (taps W[2a + q]), stacked along the output axis.
    wpad = jnp.zeros((Cin, Cout, 2 * T, 2 * T), w_torch.dtype)
    wpad = wpad.at[:, :, :k, :k].set(w_torch)
    blocks = []
    for q_y in range(2):
        for q_x in range(2):
            sub = wpad[:, :, q_y::2, q_x::2]           # (Cin, Cout, T, T)
            sub = jnp.transpose(sub, (2, 3, 0, 1))     # (a_y, a_x, Cin, Cout)
            blocks.append(sub.reshape(T * T * Cin, Cout))
    w_all = jnp.concatenate(blocks, axis=1)            # (T*T*Cin, 4*Cout)
    b_all = jnp.concatenate([b, b, b, b], axis=0)

    res = matmul_bias_act(patches, w_all, b_all, activation)
    res = res.reshape(N, My, Mx, 2, 2, Cout)           # (n, m_y, m_x, q_y, q_x, c)
    full = jnp.transpose(res, (0, 1, 3, 2, 4, 5)).reshape(N, 2 * My, 2 * Mx, Cout)
    return full[:, p: p + Ho, p: p + Wo, :]            # y = 2 m + q - p


def _hwio(w_oihw):
    return jnp.transpose(w_oihw, (2, 3, 1, 0))


def autoencoder_forward(x_nchw, prm):
    x = jnp.transpose(x_nchw, (0, 2, 3, 1))  # NCHW -> NHWC
    # encoder
    x = conv2d(x, _hwio(prm["enc_w1"]), prm["enc_b1"], 2, 1, "relu")
    x = maxpool2x2(x, 2)
    x = conv2d(x, _hwio(prm["enc_w2"]), prm["enc_b2"], 2, 1, "relu")
    x = maxpool2x2(x, 1)
    # decoder
    x = conv_transpose2d(x, prm["dec_w1"], prm["dec_b1"], 2, 0, "relu")
    x = conv_transpose2d(x, prm["dec_w2"], prm["dec_b2"], 2, 1, "relu")
    x = conv_transpose2d(x, prm["dec_w3"], prm["dec_b3"], 2, 1, "tanh")
    return jnp.transpose(x, (0, 3, 1, 2))  # NHWC -> NCHW
# TODO(synk): full single-pallas_call fusion of all 5 layers (VMEM-resident
# activations) needs in-kernel strided window gathers; kept per-layer GEMM
# kernels for robust Mosaic lowering.


# ----------------------------------------------------------------------------
# Pure-JAX reference (XLA convs) for correctness checking
# ----------------------------------------------------------------------------
def _ref_conv(x, w_hwio, b, stride, padding, lhs_dilation=(1, 1)):
    y = jax.lax.conv_general_dilated(
        x, w_hwio, window_strides=(stride, stride),
        padding=[(padding, padding), (padding, padding)],
        lhs_dilation=lhs_dilation,
        dimension_numbers=("NHWC", "HWIO", "NHWC"),
    )
    return y + b.reshape(1, 1, 1, -1)


def _ref_pool(x, stride):
    return jax.lax.reduce_window(
        x, -jnp.inf, jax.lax.max, (1, 2, 2, 1), (1, stride, stride, 1), "VALID")


def reference_forward(x_nchw, prm):
    x = jnp.transpose(x_nchw, (0, 2, 3, 1))
    x = jax.nn.relu(_ref_conv(x, _hwio(prm["enc_w1"]), prm["enc_b1"], 2, 1))
    x = _ref_pool(x, 2)
    x = jax.nn.relu(_ref_conv(x, _hwio(prm["enc_w2"]), prm["enc_b2"], 2, 1))
    x = _ref_pool(x, 1)

    def ct(x, w_torch, b, s, pad, act):
        k = w_torch.shape[2]
        w_eq = jnp.flip(jnp.transpose(w_torch, (2, 3, 0, 1)), axis=(0, 1))
        y = _ref_conv(x, w_eq, b, 1, k - 1 - pad, lhs_dilation=(s, s))
        return act(y)

    x = ct(x, prm["dec_w1"], prm["dec_b1"], 2, 0, jax.nn.relu)
    x = ct(x, prm["dec_w2"], prm["dec_b2"], 2, 1, jax.nn.relu)
    x = ct(x, prm["dec_w3"], prm["dec_b3"], 2, 1, jnp.tanh)
    return jnp.transpose(x, (0, 3, 1, 2))


# ----------------------------------------------------------------------------
def make_params(key):
    shapes = {
        "enc_w1": (16, 3, 5, 5), "enc_b1": (16,),
        "enc_w2": (8, 16, 5, 5), "enc_b2": (8,),
        "dec_w1": (8, 16, 5, 5), "dec_b1": (16,),   # ConvTranspose2d: (Cin, Cout, k, k)
        "dec_w2": (16, 8, 5, 5), "dec_b2": (8,),
        "dec_w3": (8, 3, 6, 6), "dec_b3": (3,),
    }
    params = {}
    keys = jax.random.split(key, len(shapes))
    for (name, shape), k in zip(shapes.items(), keys):
        params[name] = 0.1 * jax.random.normal(k, shape, dtype=jnp.float32)
    return params


if __name__ == "__main__":
    key = jax.random.PRNGKey(0)
    pkey, xkey = jax.random.split(key)
    params = make_params(pkey)

    # Input: NCHW, batch=2, channels=3, spatial=32 (network maps 32x32 -> 32x32).
    x = jax.random.normal(xkey, (2, 3, 32, 32), dtype=jnp.float32)

    fwd = jax.jit(autoencoder_forward)
    out = jax.block_until_ready(fwd(x, params))
    assert out.shape == (2, 3, 32, 32), out.shape

    ref = jax.block_until_ready(jax.jit(reference_forward)(x, params))
    np.testing.assert_allclose(np.asarray(out), np.asarray(ref), rtol=1e-3, atol=1e-3)

    print("KERNEL_OK")
</pallas_src>

<mosaic_0001>
module attributes {stable_mosaic.version = 11 : i64} {
  func.func @_mm_bias_act_kernel(%arg0: i32, %arg1: memref<128x75xf32, #tpu.memory_space<vmem>>, %arg2: memref<75x128xf32, #tpu.memory_space<vmem>>, %arg3: memref<1x128xf32, #tpu.memory_space<vmem>>, %arg4: memref<128x128xf32, #tpu.memory_space<vmem>>) attributes {dimension_semantics = [#tpu.dimension_semantics<parallel>], iteration_bounds = array<i64: 4>, scalar_prefetch = 0 : i64, scratch_operands = 0 : i64, tpu.core_type = #tpu.core_type<tc>, window_params = [{transform_indices = @transform_0, window_bounds = array<i64: 128, 75>}, {pipeline_mode = #tpu.pipeline_mode<synchronous>, transform_indices = @transform_1, window_bounds = array<i64: 75, 128>}, {pipeline_mode = #tpu.pipeline_mode<synchronous>, transform_indices = @transform_2, window_bounds = array<i64: 1, 128>}, {transform_indices = @transform_3, window_bounds = array<i64: 128, 128>}]} {
    %c0 = arith.constant 0 : index
    %c0_0 = arith.constant 0 : index
    %0 = vector.load %arg1[%c0, %c0_0] : memref<128x75xf32, #tpu.memory_space<vmem>>, vector<128x75xf32>
    %c0_1 = arith.constant 0 : index
    %c0_2 = arith.constant 0 : index
    %1 = vector.load %arg2[%c0_1, %c0_2] : memref<75x128xf32, #tpu.memory_space<vmem>>, vector<75x128xf32>
    %cst = arith.constant dense<0.000000e+00> : vector<128x128xf32>
    %2 = tpu.matmul %0, %1, %cst {dimension_numbers = #tpu.dot_dimension_numbers<[1], [0], [0], [1], [0, 0, 1, 1], [], []>} : vector<128x75xf32>, vector<75x128xf32>, vector<128x128xf32> -> vector<128x128xf32>
    %c0_3 = arith.constant 0 : index
    %c0_4 = arith.constant 0 : index
    %3 = vector.load %arg3[%c0_3, %c0_4] : memref<1x128xf32, #tpu.memory_space<vmem>>, vector<1x128xf32>
    %4 = vector.broadcast %3 : vector<1x128xf32> to vector<128x128xf32>
    %5 = arith.addf %2, %4 : vector<128x128xf32>
    %cst_5 = arith.constant 0.000000e+00 : f32
    %6 = vector.broadcast %cst_5 : f32 to vector<128x128xf32>
    %7 = arith.maximumf %5, %6 : vector<128x128xf32>
    %c0_6 = arith.constant 0 : index
    %c0_7 = arith.constant 0 : index
    %8 = vector.load %arg4[%c0_6, %c0_7] : memref<128x128xf32, #tpu.memory_space<vmem>>, vector<128x128xf32>
    tpu.vector_store %arg4[%c0_6, %c0_7], %7 {strides = array<i32>} : memref<128x128xf32, #tpu.memory_space<vmem>>, vector<128x128xf32>,
    return
  }
  func.func @transform_0(%arg0: i32) -> (i32, i32) {
    %c0_i32 = arith.constant 0 : i32
    %c0_i32_0 = arith.constant 0 : i32
    return %arg0, %c0_i32 : i32, i32
  }
  func.func @transform_1(%arg0: i32) -> (i32, i32) {
    %c0_i32 = arith.constant 0 : i32
    %c0_i32_0 = arith.constant 0 : i32
    %c0_i32_1 = arith.constant 0 : i32
    return %c0_i32, %c0_i32_0 : i32, i32
  }
  func.func @transform_2(%arg0: i32) -> (i32, i32) {
    %c0_i32 = arith.constant 0 : i32
    %c0_i32_0 = arith.constant 0 : i32
    %c0_i32_1 = arith.constant 0 : i32
    return %c0_i32, %c0_i32_0 : i32, i32
  }
  func.func @transform_3(%arg0: i32) -> (i32, i32) {
    %c0_i32 = arith.constant 0 : i32
    %c0_i32_0 = arith.constant 0 : i32
    return %arg0, %c0_i32 : i32, i32
  }
}

module attributes {stable_mosaic.version = 11 : i64} {
  func.func @_mm_bias_act_kernel(%arg0: i32, %arg1: memref<128x400xf32, #tpu.memory_space<vmem>>, %arg2: memref<400x128xf32, #tpu.memory_space<vmem>>, %arg3: memref<1x128xf32, #tpu.memory_space<vmem>>, %arg4: memref<128x128xf32, #tpu.memory_space<vmem>>) attributes {dimension_semantics = [#tpu.dimension_semantics<parallel>], iteration_bounds = array<i64: 1>, scalar_prefetch = 0 : i64, scratch_operands = 0 : i64, tpu.core_type = #tpu.core_type<tc>, window_params = [{transform_indices = @transform_0, window_bounds = array<i64: 128, 400>}, {pipeline_mode = #tpu.pipeline_mode<synchronous>, transform_indices = @transform_1, window_bounds = array<i64: 400, 128>}, {pipeline_mode = #tpu.pipeline_mode<synchronous>, transform_indices = @transform_2, window_bounds = array<i64: 1, 128>}, {transform_indices = @transform_3, window_bounds = array<i64: 128, 128>}]} {
    %c0 = arith.constant 0 : index
    %c0_0 = arith.constant 0 : index
    %0 = vector.load %arg1[%c0, %c0_0] : memref<128x400xf32, #tpu.memory_space<vmem>>, vector<128x400xf32>
    %c0_1 = arith.constant 0 : index
    %c0_2 = arith.constant 0 : index
    %1 = vector.load %arg2[%c0_1, %c0_2] : memref<400x128xf32, #tpu.memory_space<vmem>>, vector<400x128xf32>
    %cst = arith.constant dense<0.000000e+00> : vector<128x128xf32>
    %2 = tpu.matmul %0, %1, %cst {dimension_numbers = #tpu.dot_dimension_numbers<[1], [0], [0], [1], [0, 0, 1, 1], [], []>} : vector<128x400xf32>, vector<400x128xf32>, vector<128x128xf32> -> vector<128x128xf32>
    %c0_3 = arith.constant 0 : index
    %c0_4 = arith.constant 0 : index
    %3 = vector.load %arg3[%c0_3, %c0_4] : memref<1x128xf32, #tpu.memory_space<vmem>>, vector<1x128xf32>
    %4 = vector.broadcast %3 : vector<1x128xf32> to vector<128x128xf32>
    %5 = arith.addf %2, %4 : vector<128x128xf32>
    %cst_5 = arith.constant 0.000000e+00 : f32
    %6 = vector.broadcast %cst_5 : f32 to vector<128x128xf32>
    %7 = arith.maximumf %5, %6 : vector<128x128xf32>
    %c0_6 = arith.constant 0 : index
    %c0_7 = arith.constant 0 : index
    %8 = vector.load %arg4[%c0_6, %c0_7] : memref<128x128xf32, #tpu.memory_space<vmem>>, vector<128x128xf32>
    tpu.vector_store %arg4[%c0_6, %c0_7], %7 {strides = array<i32>} : memref<128x128xf32, #tpu.memory_space<vmem>>, vector<128x128xf32>,
    return
  }
  func.func @transform_0(%arg0: i32) -> (i32, i32) {
    %c0_i32 = arith.constant 0 : i32
    %c0_i32_0 = arith.constant 0 : i32
    return %arg0, %c0_i32 : i32, i32
  }
  func.func @transform_1(%arg0: i32) -> (i32, i32) {
    %c0_i32 = arith.constant 0 : i32
    %c0_i32_0 = arith.constant 0 : i32
    %c0_i32_1 = arith.constant 0 : i32
    return %c0_i32, %c0_i32_0 : i32, i32
  }
  func.func @transform_2(%arg0: i32) -> (i32, i32) {
    %c0_i32 = arith.constant 0 : i32
    %c0_i32_0 = arith.constant 0 : i32
    %c0_i32_1 = arith.constant 0 : i32
    return %c0_i32, %c0_i32_0 : i32, i32
  }
  func.func @transform_3(%arg0: i32) -> (i32, i32) {
    %c0_i32 = arith.constant 0 : i32
    %c0_i32_0 = arith.constant 0 : i32
    return %arg0, %c0_i32 : i32, i32
  }
}

module attributes {stable_mosaic.version = 11 : i64} {
  func.func @_mm_bias_act_kernel(%arg0: i32, %arg1: memref<128x72xf32, #tpu.memory_space<vmem>>, %arg2: memref<72x128xf32, #tpu.memory_space<vmem>>, %arg3: memref<1x128xf32, #tpu.memory_space<vmem>>, %arg4: memref<128x128xf32, #tpu.memory_space<vmem>>) attributes {dimension_semantics = [#tpu.dimension_semantics<parallel>], iteration_bounds = array<i64: 1>, scalar_prefetch = 0 : i64, scratch_operands = 0 : i64, tpu.core_type = #tpu.core_type<tc>, window_params = [{transform_indices = @transform_0, window_bounds = array<i64: 128, 72>}, {pipeline_mode = #tpu.pipeline_mode<synchronous>, transform_indices = @transform_1, window_bounds = array<i64: 72, 128>}, {pipeline_mode = #tpu.pipeline_mode<synchronous>, transform_indices = @transform_2, window_bounds = array<i64: 1, 128>}, {transform_indices = @transform_3, window_bounds = array<i64: 128, 128>}]} {
    %c0 = arith.constant 0 : index
    %c0_0 = arith.constant 0 : index
    %0 = vector.load %arg1[%c0, %c0_0] : memref<128x72xf32, #tpu.memory_space<vmem>>, vector<128x72xf32>
    %c0_1 = arith.constant 0 : index
    %c0_2 = arith.constant 0 : index
    %1 = vector.load %arg2[%c0_1, %c0_2] : memref<72x128xf32, #tpu.memory_space<vmem>>, vector<72x128xf32>
    %cst = arith.constant dense<0.000000e+00> : vector<128x128xf32>
    %2 = tpu.matmul %0, %1, %cst {dimension_numbers = #tpu.dot_dimension_numbers<[1], [0], [0], [1], [0, 0, 1, 1], [], []>} : vector<128x72xf32>, vector<72x128xf32>, vector<128x128xf32> -> vector<128x128xf32>
    %c0_3 = arith.constant 0 : index
    %c0_4 = arith.constant 0 : index
    %3 = vector.load %arg3[%c0_3, %c0_4] : memref<1x128xf32, #tpu.memory_space<vmem>>, vector<1x128xf32>
    %4 = vector.broadcast %3 : vector<1x128xf32> to vector<128x128xf32>
    %5 = arith.addf %2, %4 : vector<128x128xf32>
    %cst_5 = arith.constant 0.000000e+00 : f32
    %6 = vector.broadcast %cst_5 : f32 to vector<128x128xf32>
    %7 = arith.maximumf %5, %6 : vector<128x128xf32>
    %c0_6 = arith.constant 0 : index
    %c0_7 = arith.constant 0 : index
    %8 = vector.load %arg4[%c0_6, %c0_7] : memref<128x128xf32, #tpu.memory_space<vmem>>, vector<128x128xf32>
    tpu.vector_store %arg4[%c0_6, %c0_7], %7 {strides = array<i32>} : memref<128x128xf32, #tpu.memory_space<vmem>>, vector<128x128xf32>,
    return
  }
  func.func @transform_0(%arg0: i32) -> (i32, i32) {
    %c0_i32 = arith.constant 0 : i32
    %c0_i32_0 = arith.constant 0 : i32
    return %arg0, %c0_i32 : i32, i32
  }
  func.func @transform_1(%arg0: i32) -> (i32, i32) {
    %c0_i32 = arith.constant 0 : i32
    %c0_i32_0 = arith.constant 0 : i32
    %c0_i32_1 = arith.constant 0 : i32
    return %c0_i32, %c0_i32_0 : i32, i32
  }
  func.func @transform_2(%arg0: i32) -> (i32, i32) {
    %c0_i32 = arith.constant 0 : i32
    %c0_i32_0 = arith.constant 0 : i32
    %c0_i32_1 = arith.constant 0 : i32
    return %c0_i32, %c0_i32_0 : i32, i32
  }
  func.func @transform_3(%arg0: i32) -> (i32, i32) {
    %c0_i32 = arith.constant 0 : i32
    %c0_i32_0 = arith.constant 0 : i32
    return %arg0, %c0_i32 : i32, i32
  }
}

module attributes {stable_mosaic.version = 11 : i64} {
  func.func @_mm_bias_act_kernel(%arg0: i32, %arg1: memref<128x144xf32, #tpu.memory_space<vmem>>, %arg2: memref<144x128xf32, #tpu.memory_space<vmem>>, %arg3: memref<1x128xf32, #tpu.memory_space<vmem>>, %arg4: memref<128x128xf32, #tpu.memory_space<vmem>>) attributes {dimension_semantics = [#tpu.dimension_semantics<parallel>], iteration_bounds = array<i64: 1>, scalar_prefetch = 0 : i64, scratch_operands = 0 : i64, tpu.core_type = #tpu.core_type<tc>, window_params = [{transform_indices = @transform_0, window_bounds = array<i64: 128, 144>}, {pipeline_mode = #tpu.pipeline_mode<synchronous>, transform_indices = @transform_1, window_bounds = array<i64: 144, 128>}, {pipeline_mode = #tpu.pipeline_mode<synchronous>, transform_indices = @transform_2, window_bounds = array<i64: 1, 128>}, {transform_indices = @transform_3, window_bounds = array<i64: 128, 128>}]} {
    %c0 = arith.constant 0 : index
    %c0_0 = arith.constant 0 : index
    %0 = vector.load %arg1[%c0, %c0_0] : memref<128x144xf32, #tpu.memory_space<vmem>>, vector<128x144xf32>
    %c0_1 = arith.constant 0 : index
    %c0_2 = arith.constant 0 : index
    %1 = vector.load %arg2[%c0_1, %c0_2] : memref<144x128xf32, #tpu.memory_space<vmem>>, vector<144x128xf32>
    %cst = arith.constant dense<0.000000e+00> : vector<128x128xf32>
    %2 = tpu.matmul %0, %1, %cst {dimension_numbers = #tpu.dot_dimension_numbers<[1], [0], [0], [1], [0, 0, 1, 1], [], []>} : vector<128x144xf32>, vector<144x128xf32>, vector<128x128xf32> -> vector<128x128xf32>
    %c0_3 = arith.constant 0 : index
    %c0_4 = arith.constant 0 : index
    %3 = vector.load %arg3[%c0_3, %c0_4] : memref<1x128xf32, #tpu.memory_space<vmem>>, vector<1x128xf32>
    %4 = vector.broadcast %3 : vector<1x128xf32> to vector<128x128xf32>
    %5 = arith.addf %2, %4 : vector<128x128xf32>
    %cst_5 = arith.constant 0.000000e+00 : f32
    %6 = vector.broadcast %cst_5 : f32 to vector<128x128xf32>
    %7 = arith.maximumf %5, %6 : vector<128x128xf32>
    %c0_6 = arith.constant 0 : index
    %c0_7 = arith.constant 0 : index
    %8 = vector.load %arg4[%c0_6, %c0_7] : memref<128x128xf32, #tpu.memory_space<vmem>>, vector<128x128xf32>
    tpu.vector_store %arg4[%c0_6, %c0_7], %7 {strides = array<i32>} : memref<128x128xf32, #tpu.memory_space<vmem>>, vector<128x128xf32>,
    return
  }
  func.func @transform_0(%arg0: i32) -> (i32, i32) {
    %c0_i32 = arith.constant 0 : i32
    %c0_i32_0 = arith.constant 0 : i32
    return %arg0, %c0_i32 : i32, i32
  }
  func.func @transform_1(%arg0: i32) -> (i32, i32) {
    %c0_i32 = arith.constant 0 : i32
    %c0_i32_0 = arith.constant 0 : i32
    %c0_i32_1 = arith.constant 0 : i32
    return %c0_i32, %c0_i32_0 : i32, i32
  }
  func.func @transform_2(%arg0: i32) -> (i32, i32) {
    %c0_i32 = arith.constant 0 : i32
    %c0_i32_0 = arith.constant 0 : i32
    %c0_i32_1 = arith.constant 0 : i32
    return %c0_i32, %c0_i32_0 : i32, i32
  }
  func.func @transform_3(%arg0: i32) -> (i32, i32) {
    %c0_i32 = arith.constant 0 : i32
    %c0_i32_0 = arith.constant 0 : i32
    return %arg0, %c0_i32 : i32, i32
  }
}

module attributes {stable_mosaic.version = 11 : i64} {
  func.func @_mm_bias_act_kernel(%arg0: i32, %arg1: memref<128x72xf32, #tpu.memory_space<vmem>>, %arg2: memref<72x128xf32, #tpu.memory_space<vmem>>, %arg3: memref<1x128xf32, #tpu.memory_space<vmem>>, %arg4: memref<128x128xf32, #tpu.memory_space<vmem>>) attributes {dimension_semantics = [#tpu.dimension_semantics<parallel>], iteration_bounds = array<i64: 5>, scalar_prefetch = 0 : i64, scratch_operands = 0 : i64, tpu.core_type = #tpu.core_type<tc>, window_params = [{transform_indices = @transform_0, window_bounds = array<i64: 128, 72>}, {pipeline_mode = #tpu.pipeline_mode<synchronous>, transform_indices = @transform_1, window_bounds = array<i64: 72, 128>}, {pipeline_mode = #tpu.pipeline_mode<synchronous>, transform_indices = @transform_2, window_bounds = array<i64: 1, 128>}, {transform_indices = @transform_3, window_bounds = array<i64: 128, 128>}]} {
    %c0 = arith.constant 0 : index
    %c0_0 = arith.constant 0 : index
    %0 = vector.load %arg1[%c0, %c0_0] : memref<128x72xf32, #tpu.memory_space<vmem>>, vector<128x72xf32>
    %c0_1 = arith.constant 0 : index
    %c0_2 = arith.constant 0 : index
    %1 = vector.load %arg2[%c0_1, %c0_2] : memref<72x128xf32, #tpu.memory_space<vmem>>, vector<72x128xf32>
    %cst = arith.constant dense<0.000000e+00> : vector<128x128xf32>
    %2 = tpu.matmul %0, %1, %cst {dimension_numbers = #tpu.dot_dimension_numbers<[1], [0], [0], [1], [0, 0, 1, 1], [], []>} : vector<128x72xf32>, vector<72x128xf32>, vector<128x128xf32> -> vector<128x128xf32>
    %c0_3 = arith.constant 0 : index
    %c0_4 = arith.constant 0 : index
    %3 = vector.load %arg3[%c0_3, %c0_4] : memref<1x128xf32, #tpu.memory_space<vmem>>, vector<1x128xf32>
    %4 = vector.broadcast %3 : vector<1x128xf32> to vector<128x128xf32>
    %5 = arith.addf %2, %4 : vector<128x128xf32>
    %6 = math.tanh %5 : vector<128x128xf32>
    %c0_5 = arith.constant 0 : index
    %c0_6 = arith.constant 0 : index
    %7 = vector.load %arg4[%c0_5, %c0_6] : memref<128x128xf32, #tpu.memory_space<vmem>>, vector<128x128xf32>
    tpu.vector_store %arg4[%c0_5, %c0_6], %6 {strides = array<i32>} : memref<128x128xf32, #tpu.memory_space<vmem>>, vector<128x128xf32>,
    return
  }
  func.func @transform_0(%arg0: i32) -> (i32, i32) {
    %c0_i32 = arith.constant 0 : i32
    %c0_i32_0 = arith.constant 0 : i32
    return %arg0, %c0_i32 : i32, i32
  }
  func.func @transform_1(%arg0: i32) -> (i32, i32) {
    %c0_i32 = arith.constant 0 : i32
    %c0_i32_0 = arith.constant 0 : i32
    %c0_i32_1 = arith.constant 0 : i32
    return %c0_i32, %c0_i32_0 : i32, i32
  }
  func.func @transform_2(%arg0: i32) -> (i32, i32) {
    %c0_i32 = arith.constant 0 : i32
    %c0_i32_0 = arith.constant 0 : i32
    %c0_i32_1 = arith.constant 0 : i32
    return %c0_i32, %c0_i32_0 : i32, i32
  }
  func.func @transform_3(%arg0: i32) -> (i32, i32) {
    %c0_i32 = arith.constant 0 : i32
    %c0_i32_0 = arith.constant 0 : i32
    return %arg0, %c0_i32 : i32, i32
  }
}

</mosaic_0001>

<llo_original>
// kernel: autoencoder_forward.5
$region0: #{autoencoder_forward.5}
  #allocation0 [shape = 'u32[]', space=smem, size = 0x4, offset = 0x4, fixed_abs, tag = 'smem constant byte address 0x4 - core index']
  #allocation1 [shape = 'u32[144,128]{1,0:T(1,128)}', space=vmem, size = 0x12000, scoped, tag = 'internal scratch']
  %s0 = inlined_call_operand.vmem [shape: f32[512,75], index: 0, kind: input, shape index: {}]
  %s1 = inlined_call_operand.vmem [shape: f32[75,128], index: 1, kind: input, shape index: {}]
  %s2 = inlined_call_operand.vmem [shape: f32[1,128], index: 2, kind: input, shape index: {}]
  %s3 = inlined_call_operand.vmem [shape: f32[512,128], index: 3, kind: output, shape index: {}]
  %s4 = sld [smem:[#allocation0]]
  $region45: #{autoencoder_forward.5} parent=0
    _
  %s6 = ssub.s32 1, %s4
  %s7 = scalar_select 0, %s6, %s4
  loop: start=0, step=1, limit=6
  $region2: #{autoencoder_forward.5} parent=0 // loop_pre_header
    _
  $region3: #{autoencoder_forward.5} parent=0 // loop_header
    %s9 = sphi 0, %s13
    %p10 = scmp.ge.s32.totalorder %s9, 6
    %s19 = sphi 0, %s21
    %s22 = sphi 0, %s19
    %s23 = sphi 0, %s22
    %s39 = sphi 0, %s23
    %s43 = sphi 0, %s43
    %s45 = sphi 0, %s43
    %s46 = sphi 0, %s45
    %s60 = sphi 0, %s46
    %s64 = sphi 0, %s64
    %s66 = sphi 0, %s64
    %s67 = sphi 0, %s66
    %s81 = sphi 0, %s67
    %s87 = sphi 0, %s89
    %s90 = sphi 0, %s87
    %s91 = sphi 0, %s90
    %s107 = sphi 0, %s91
  $region4: #{autoencoder_forward.5} parent=0 // loop_header_branch
    %12 = sbr.rel (%p10) target = $region8
  $region5: #{autoencoder_forward.5} parent=0 // loop_body
    %s14 = ssub.s32 %s9, 1
    %s15 = ssub.s32 %s9, 2
    %s16 = sadd.s32 %s9, 1
    %s17 = ssub.s32 %s9, %s16
    %p18 = scmp.eq.s32.totalorder %s17, 0
    %s20 = sadd.s32 %s19, 1
    %s21 = scalar_select %p18, %s19, %s20
    %p24 = pneg %p18
    %p25 = scmp.eq.s32.totalorder %s9, 3
    %p26 = por %p24, %p25
    %p27 = scmp.ne.s32.totalorder %s19, %s22
    %p28 = scmp.eq.s32.totalorder %s9, 0
    %p29 = por %p27, %p28
    %p30 = scmp.ne.s32.totalorder %s19, %s22
    %p31 = scmp.eq.s32.totalorder %s14, 3
    %p32 = por %p30, %p31
    %p33 = scmp.ne.s32.totalorder %s22, %s23
    %p34 = scmp.eq.s32.totalorder %s14, 0
    %p35 = por %p33, %p34
    %p36 = scmp.ne.s32.totalorder %s22, %s23
    %p37 = scmp.eq.s32.totalorder %s15, 3
    %p38 = por %p36, %p37
    %p40 = scmp.ne.s32.totalorder %s23, %s39
    %p41 = scmp.eq.s32.totalorder %s15, 0
    %p42 = por %p40, %p41
    %s44 = sadd.s32 %s43, 1
    %p47 = scmp.eq.s32.totalorder %s9, 3
    %p48 = scmp.ne.s32.totalorder %s43, %s45
    %p49 = scmp.eq.s32.totalorder %s9, 0
    %p50 = por %p48, %p49
    %p51 = scmp.ne.s32.totalorder %s43, %s45
    %p52 = scmp.eq.s32.totalorder %s14, 3
    %p53 = por %p51, %p52
    %p54 = scmp.ne.s32.totalorder %s45, %s46
    %p55 = scmp.eq.s32.totalorder %s14, 0
    %p56 = por %p54, %p55
    %p57 = scmp.ne.s32.totalorder %s45, %s46
    %p58 = scmp.eq.s32.totalorder %s15, 3
    %p59 = por %p57, %p58
    %p61 = scmp.ne.s32.totalorder %s46, %s60
    %p62 = scmp.eq.s32.totalorder %s15, 0
    %p63 = por %p61, %p62
    %s65 = sadd.s32 %s64, 1
    %p68 = scmp.eq.s32.totalorder %s9, 3
    %p69 = scmp.ne.s32.totalorder %s64, %s66
    %p70 = scmp.eq.s32.totalorder %s9, 0
    %p71 = por %p69, %p70
    %p72 = scmp.ne.s32.totalorder %s64, %s66
    %p73 = scmp.eq.s32.totalorder %s14, 3
    %p74 = por %p72, %p73
    %p75 = scmp.ne.s32.totalorder %s66, %s67
    %p76 = scmp.eq.s32.totalorder %s14, 0
    %p77 = por %p75, %p76
    %p78 = scmp.ne.s32.totalorder %s66, %s67
    %p79 = scmp.eq.s32.totalorder %s15, 3
    %p80 = por %p78, %p79
    %p82 = scmp.ne.s32.totalorder %s67, %s81
    %p83 = scmp.eq.s32.totalorder %s15, 0
    %p84 = por %p82, %p83
    %s85 = ssub.s32 %s9, %s16
    %p86 = scmp.eq.s32.totalorder %s85, 0
    %s88 = sadd.s32 %s87, 1
    %s89 = scalar_select %p86, %s87, %s88
    %p92 = pneg %p86
    %p93 = scmp.eq.s32.totalorder %s9, 3
    %p94 = por %p92, %p93
    %p95 = scmp.ne.s32.totalorder %s87, %s90
    %p96 = scmp.eq.s32.totalorder %s9, 0
    %p97 = por %p95, %p96
    %p98 = scmp.ne.s32.totalorder %s87, %s90
    %p99 = scmp.eq.s32.totalorder %s14, 3
    %p100 = por %p98, %p99
    %p101 = scmp.ne.s32.totalorder %s90, %s91
    %p102 = scmp.eq.s32.totalorder %s14, 0
    %p103 = por %p101, %p102
    %p104 = scmp.ne.s32.totalorder %s90, %s91
    %p105 = scmp.eq.s32.totalorder %s15, 3
    %p106 = por %p104, %p105
    %p108 = scmp.ne.s32.totalorder %s91, %s107
    %p109 = scmp.eq.s32.totalorder %s15, 0
    %p110 = por %p108, %p109
    %p111 = scmp.le.s32.totalorder 1, %s9
    %p112 = scmp.lt.s32.totalorder %s9, 5
    %p113 = pnand %p111, %p112
    %p114 = pneg %p113
    // Predicated region
    $region9: #{autoencoder_forward.5} parent=5 // pred_check
      _
    $region10: #{autoencoder_forward.5} parent=5 // pred_check_branch
      %116 = sbr.rel (%p113) target = $region12
    $region11: #{autoencoder_forward.5} parent=5 // pred_region
      %s117 = ssub.s32 %s9, 1
      // Predicated region
      $region13: #{autoencoder_forward.5} parent=11 // pred_check
        %p118 = pneg %p56
      $region14: #{autoencoder_forward.5} parent=11 // pred_check_branch
        %120 = sbr.rel (%p118) target = $region16
      $region15: #{autoencoder_forward.5} parent=11 // pred_region
        _
      $region16: #{autoencoder_forward.5} parent=11 // pred_fallthru
        _
      // Predicated region
      $region17: #{autoencoder_forward.5} parent=11 // pred_check
        %p121 = pneg %p77
      $region18: #{autoencoder_forward.5} parent=11 // pred_check_branch
        %123 = sbr.rel (%p121) target = $region20
      $region19: #{autoencoder_forward.5} parent=11 // pred_region
        _
      $region20: #{autoencoder_forward.5} parent=11 // pred_fallthru
        _
    $region12: #{autoencoder_forward.5} parent=5 // pred_fallthru
      _
    %p124 = scmp.lt.s32.totalorder %s9, 4
    // Predicated region
    $region21: #{autoencoder_forward.5} parent=5 // pred_check
      %p125 = pneg %p124
    $region22: #{autoencoder_forward.5} parent=5 // pred_check_branch
      %127 = sbr.rel (%p125) target = $region24
    $region23: #{autoencoder_forward.5} parent=5 // pred_region
      // Predicated region
      $region25: #{autoencoder_forward.5} parent=23 // pred_check
        %p128 = pneg %p29
      $region26: #{autoencoder_forward.5} parent=23 // pred_check_branch
        %130 = sbr.rel (%p128) target = $region28
      $region27: #{autoencoder_forward.5} parent=23 // pred_region
        %s131 = smul.u32 16, %s9
        %p132 = scmp.lt.s32.totalorder %s131, 63
        %s133 = scalar_select %p132, %s131, 63
        %s134 = smul.addr %s133, 8
        %s135 = scalar_lea.vmem %s0, %s134
        %s136 = smul.u32 16, %s9
      $region28: #{autoencoder_forward.5} parent=23 // pred_fallthru
        _
    $region24: #{autoencoder_forward.5} parent=5 // pred_fallthru
      _
    %p137 = scmp.le.s32.totalorder 1, %s9
    %p138 = scmp.lt.s32.totalorder %s9, 5
    %p139 = pnand %p137, %p138
    %p140 = pneg %p139
    // Predicated region
    $region29: #{autoencoder_forward.5} parent=5 // pred_check
      _
    $region30: #{autoencoder_forward.5} parent=5 // pred_check_branch
      %142 = sbr.rel (%p139) target = $region32
    $region31: #{autoencoder_forward.5} parent=5 // pred_region
      %s143 = ssub.s32 %s9, 1
      %s144 = smul.u32 16, %s14
      %p145 = scmp.lt.s32.totalorder %s144, 63
      %s146 = scalar_select %p145, %s144, 63
      %s147 = smul.addr %s146, 8
      %s148 = scalar_lea.vmem %s0, %s147
      %p149 = pneg %p35
      %p150 = pneg %p32
      %p151 = pneg %p56
      %p152 = pneg %p53
      %p153 = pneg %p77
      %p154 = pneg %p74
      %p155 = pneg %p103
      %p156 = pneg %p100
      %s157 = smul.u32 16, %s14
      %p158 = scmp.lt.s32.totalorder %s157, 63
      %s159 = scalar_select %p158, %s157, 63
      %s160 = smul.addr %s159, 8
      %s161 = scalar_lea.vmem %s3, %s160
      %s162 = smul.u32 16, %s14
      %p163 = scmp.lt.s32.totalorder %s162, 63
      %s164 = scalar_select %p163, %s162, 63
      %s165 = smul.addr %s164, 8
      %s166 = scalar_lea.vmem %s0, %s165
      %s167 = smul.u32 16, %s14
      %s168 = smul.u32 16, %s14
      %p169 = scmp.lt.s32.totalorder %s168, 63
      %s170 = scalar_select %p169, %s168, 63
      %s171 = smul.addr %s170, 8
      %s172 = scalar_lea.vmem %s3, %s171
      %s173 = smul.u32 16, %s14
      %v174 = vld [vmem:[%s166] sm:$0xff]
      %v175 = vld [vmem:[%s166 + $0x8] sm:$0xff]
      %v176 = vld [vmem:[%s166 + $0x10] sm:$0xff]
      %v177 = vld [vmem:[%s166 + $0x18] sm:$0xff]
      %v178 = vld [vmem:[%s166 + $0x20] sm:$0xff]
      %v179 = vld [vmem:[%s166 + $0x28] sm:$0xff]
      %v180 = vld [vmem:[%s166 + $0x30] sm:$0xff]
      %v181 = vld [vmem:[%s166 + $0x38] sm:$0xff]
      %v182 = vld [vmem:[%s166 + $0x40] sm:$0xff]
      %v183 = vld [vmem:[%s166 + $0x48] sm:$0xff]
      %v184 = vld [vmem:[%s166 + $0x50] sm:$0xff]
      %v185 = vld [vmem:[%s166 + $0x58] sm:$0xff]
      %v186 = vld [vmem:[%s166 + $0x60] sm:$0xff]
      %v187 = vld [vmem:[%s166 + $0x68] sm:$0xff]
      %v188 = vld [vmem:[%s166 + $0x70] sm:$0xff]
      %v189 = vld [vmem:[%s166 + $0x78] sm:$0xff]
      %v190 = vld [vmem:[%s1] sm:$0xff]
      %v191 = vld [vmem:[%s1 + $0x8] sm:$0xff]
      %v192 = vld [vmem:[%s1 + $0x10] sm:$0xff]
      %v193 = vld [vmem:[%s1 + $0x18] sm:$0xff]
      %v194 = vld [vmem:[%s1 + $0x20] sm:$0xff]
      %v195 = vld [vmem:[%s1 + $0x28] sm:$0xff]
      %v196 = vld [vmem:[%s1 + $0x30] sm:$0xff]
      %v197 = vld [vmem:[%s1 + $0x38] sm:$0xff]
      %v198 = vld [vmem:[%s1 + $0x40] sm:$0xff]
      %v199 = vld [vmem:[%s1 + $0x48] sm:$0x7]
      %v200 = vld [vmem:[%s2] sm:$0x1]
      %v202 = vlaneseq
      %v203 = vshrl.u32 %v202, 7
      %v204 = vsub.s32 0, %v203
      %v205 = vrot.slane %v200, %v204
      %vm207 = vcmask 613376
      %v209 = vsel %vm207, %v174, 0
      %v212 = vsel %vm207, %v175, 0
      %v215 = vsel %vm207, %v176, 0
      %v218 = vsel %vm207, %v177, 0
      %v221 = vsel %vm207, %v178, 0
      %v224 = vsel %vm207, %v179, 0
      %v227 = vsel %vm207, %v180, 0
      %v230 = vsel %vm207, %v181, 0
      %v233 = vsel %vm207, %v182, 0
      %v236 = vsel %vm207, %v183, 0
      %v239 = vsel %vm207, %v184, 0
      %v242 = vsel %vm207, %v185, 0
      %v245 = vsel %vm207, %v186, 0
      %v248 = vsel %vm207, %v187, 0
      %v251 = vsel %vm207, %v188, 0
      %v254 = vsel %vm207, %v189, 0
      %vm256 = vcmask 1042432
      %v258 = vsel %vm256, %v199, 0
      %260 = vmatprep.subr.mxu0 0.0
      %261 = vmatpush1.msra.mxu0 0.0
      %262 = vmatprep.subr.mxu0 0.0
      %263 = vmatpush1.msra.mxu0 0.0
      %264 = vmatprep.subr.mxu0 0.0
      %265 = vmatpush1.msra.mxu0 0.0
      %266 = vmatprep.subr.mxu0 0.0
      %267 = vmatpush1.msra.mxu0 0.0
      %268 = vmatprep.subr.mxu0 0.0
      %269 = vmatpush1.msra.mxu0 0.0
      %270 = vmatprep.subr.mxu0 0.0
      %271 = vmatpush1.msra.mxu0 0.0
      %272 = vmatprep.subr.mxu0 0.0
      %273 = vmatpush1.msra.mxu0 %v258
      %274 = vmatprep.subr.mxu0 0.0
      %275 = vmatpush1.msra.mxu0 %v198
      %276 = vmatprep.subr.mxu0 0.0
      %277 = vmatpush1.msra.mxu0 %v197
      %278 = vmatprep.subr.mxu0 0.0
      %279 = vmatpush1.msra.mxu0 %v196
      %280 = vmatprep.subr.mxu0 0.0
      %281 = vmatpush1.msra.mxu0 %v195
      %282 = vmatprep.subr.mxu0 0.0
      %283 = vmatpush1.msra.mxu0 %v194
      %284 = vmatprep.subr.mxu0 0.0
      %285 = vmatpush1.msra.mxu0 %v193
      %286 = vmatprep.subr.mxu0 0.0
      %287 = vmatpush1.msra.mxu0 %v192
      %288 = vmatprep.subr.mxu0 0.0
      %289 = vmatpush1.msra.mxu0 %v191
      %290 = vmatprep.subr.mxu0 0.0
      %291 = vmatpush1.msra.mxu0 %v190
      %292 = vmatprep.subr.mxu0 0.0
      %293 = vmatpush2.msra.mxu0 0.0
      %294 = vmatprep.subr.mxu0 0.0
      %295 = vmatpush2.msra.mxu0 0.0
      %296 = vmatprep.subr.mxu0 0.0
      %297 = vmatpush2.msra.mxu0 0.0
      %298 = vmatprep.subr.mxu0 0.0
      %299 = vmatpush2.msra.mxu0 0.0
      %300 = vmatprep.subr.mxu0 0.0
      %301 = vmatpush2.msra.mxu0 0.0
      %302 = vmatprep.subr.mxu0 0.0
      %303 = vmatpush2.msra.mxu0 0.0
      %304 = vmatprep.subr.mxu0 0.0
      %305 = vmatpush2.msra.mxu0 0.0
      %306 = vmatprep.subr.mxu0 0.0
      %307 = vmatpush2.msra.mxu0 0.0
      %308 = vmatprep.subr.mxu0 0.0
      %309 = vmatpush2.msra.mxu0 0.0
      %310 = vmatprep.subr.mxu0 0.0
      %311 = vmatpush2.msra.mxu0 0.0
      %312 = vmatprep.subr.mxu0 0.0
      %313 = vmatpush2.msra.mxu0 0.0
      %314 = vmatprep.subr.mxu0 0.0
      %315 = vmatpush2.msra.mxu0 0.0
      %316 = vmatprep.subr.mxu0 0.0
      %317 = vmatpush2.msra.mxu0 0.0
      %318 = vmatprep.subr.mxu0 0.0
      %319 = vmatpush2.msra.mxu0 0.0
      %320 = vmatprep.subr.mxu0 0.0
      %321 = vmatpush2.msra.mxu0 0.0
      %322 = vmatprep.subr.mxu0 0.0
      %323 = vmatpush2.msra.mxu0 0.0
      %324 = vmatprep.mubr.f32.mxu0 0.0
      %325 = vmatmul.mubr.f32.gmra.mxu0 %v209
      %v326 = vpop.f32.mrf.mxu0
      %v327 = vadd.f32 %v205, %v326
      %v328 = vpop.f32.mrf.mxu0
      %329 = vmatprep.mubr.f32.mxu0 0.0
      %330 = vmatmul.mubr.f32.gmra.mxu0 %v212
      %v331 = vpop.f32.mrf.mxu0
      %v332 = vadd.f32 %v205, %v331
      %v333 = vpop.f32.mrf.mxu0
      %334 = vmatprep.mubr.f32.mxu0 0.0
      %335 = vmatmul.mubr.f32.gmra.mxu0 %v215
      %v336 = vpop.f32.mrf.mxu0
      %v337 = vadd.f32 %v205, %v336
      %v338 = vpop.f32.mrf.mxu0
      %339 = vmatprep.mubr.f32.mxu0 0.0
      %340 = vmatmul.mubr.f32.gmra.mxu0 %v218
      %v341 = vpop.f32.mrf.mxu0
      %v342 = vadd.f32 %v205, %v341
      %v343 = vpop.f32.mrf.mxu0
      %344 = vmatprep.mubr.f32.mxu0 0.0
      %345 = vmatmul.mubr.f32.gmra.mxu0 %v221
      %v346 = vpop.f32.mrf.mxu0
      %v347 = vadd.f32 %v205, %v346
      %v348 = vpop.f32.mrf.mxu0
      %349 = vmatprep.mubr.f32.mxu0 0.0
      %350 = vmatmul.mubr.f32.gmra.mxu0 %v224
      %v351 = vpop.f32.mrf.mxu0
      %v352 = vadd.f32 %v205, %v351
      %v353 = vpop.f32.mrf.mxu0
      %354 = vmatprep.mubr.f32.mxu0 0.0
      %355 = vmatmul.mubr.f32.gmra.mxu0 %v227
      %v356 = vpop.f32.mrf.mxu0
      %v357 = vadd.f32 %v205, %v356
      %v358 = vpop.f32.mrf.mxu0
      %359 = vmatprep.mubr.f32.mxu0 0.0
      %360 = vmatmul.mubr.f32.gmra.mxu0 %v230
      %v361 = vpop.f32.mrf.mxu0
      %v362 = vadd.f32 %v205, %v361
      %v363 = vpop.f32.mrf.mxu0
      %364 = vmatprep.mubr.f32.mxu0 0.0
      %365 = vmatmul.mubr.f32.gmra.mxu0 %v233
      %v366 = vpop.f32.mrf.mxu0
      %v367 = vadd.f32 %v205, %v366
      %v368 = vpop.f32.mrf.mxu0
      %369 = vmatprep.mubr.f32.mxu0 0.0
      %370 = vmatmul.mubr.f32.gmra.mxu0 %v236
      %v371 = vpop.f32.mrf.mxu0
      %v372 = vadd.f32 %v205, %v371
      %v373 = vpop.f32.mrf.mxu0
      %374 = vmatprep.mubr.f32.mxu0 0.0
      %375 = vmatmul.mubr.f32.gmra.mxu0 %v239
      %v376 = vpop.f32.mrf.mxu0
      %v377 = vadd.f32 %v205, %v376
      %v378 = vpop.f32.mrf.mxu0
      %379 = vmatprep.mubr.f32.mxu0 0.0
      %380 = vmatmul.mubr.f32.gmra.mxu0 %v242
      %v381 = vpop.f32.mrf.mxu0
      %v382 = vadd.f32 %v205, %v381
      %v383 = vpop.f32.mrf.mxu0
      %384 = vmatprep.mubr.f32.mxu0 0.0
      %385 = vmatmul.mubr.f32.gmra.mxu0 %v245
      %v386 = vpop.f32.mrf.mxu0
      %v387 = vadd.f32 %v205, %v386
      %v388 = vpop.f32.mrf.mxu0
      %389 = vmatprep.mubr.f32.mxu0 0.0
      %390 = vmatmul.mubr.f32.gmra.mxu0 %v248
      %v391 = vpop.f32.mrf.mxu0
      %v392 = vadd.f32 %v205, %v391
      %v393 = vpop.f32.mrf.mxu0
      %394 = vmatprep.mubr.f32.mxu0 0.0
      %395 = vmatmul.mubr.f32.gmra.mxu0 %v251
      %v396 = vpop.f32.mrf.mxu0
      %v397 = vadd.f32 %v205, %v396
      %v398 = vpop.f32.mrf.mxu0
      %399 = vmatprep.mubr.f32.mxu0 0.0
      %400 = vmatmul.mubr.f32.gmra.mxu0 %v254
      %v401 = vpop.f32.mrf.mxu0
      %v402 = vadd.f32 %v205, %v401
      %v403 = vpop.f32.mrf.mxu0
      %404 = vdwg.mxu0
      %v405 = vmax.f32 %v327, 0.0
      %v406 = vmax.f32 %v332, 0.0
      %v407 = vmax.f32 %v337, 0.0
      %v408 = vmax.f32 %v342, 0.0
      %v409 = vmax.f32 %v347, 0.0
      %v410 = vmax.f32 %v352, 0.0
      %v411 = vmax.f32 %v357, 0.0
      %v412 = vmax.f32 %v362, 0.0
      %v413 = vmax.f32 %v367, 0.0
      %v414 = vmax.f32 %v372, 0.0
      %v415 = vmax.f32 %v377, 0.0
      %v416 = vmax.f32 %v382, 0.0
      %v417 = vmax.f32 %v387, 0.0
      %v418 = vmax.f32 %v392, 0.0
      %v419 = vmax.f32 %v397, 0.0
      %v420 = vmax.f32 %v402, 0.0
      %421 = vst [vmem:[%s172] sm:$0xff] %v405
      %422 = vst [vmem:[%s172 + $0x8] sm:$0xff] %v406
      %423 = vst [vmem:[%s172 + $0x10] sm:$0xff] %v407
      %424 = vst [vmem:[%s172 + $0x18] sm:$0xff] %v408
      %425 = vst [vmem:[%s172 + $0x20] sm:$0xff] %v409
      %426 = vst [vmem:[%s172 + $0x28] sm:$0xff] %v410
      %427 = vst [vmem:[%s172 + $0x30] sm:$0xff] %v411
      %428 = vst [vmem:[%s172 + $0x38] sm:$0xff] %v412
      %429 = vst [vmem:[%s172 + $0x40] sm:$0xff] %v413
      %430 = vst [vmem:[%s172 + $0x48] sm:$0xff] %v414
      %431 = vst [vmem:[%s172 + $0x50] sm:$0xff] %v415
      %432 = vst [vmem:[%s172 + $0x58] sm:$0xff] %v416
      %433 = vst [vmem:[%s172 + $0x60] sm:$0xff] %v417
      %434 = vst [vmem:[%s172 + $0x68] sm:$0xff] %v418
      %435 = vst [vmem:[%s172 + $0x70] sm:$0xff] %v419
      %436 = vst [vmem:[%s172 + $0x78] sm:$0xff] %v420
      %s437 = smul.u32 16, %s14
      %p438 = scmp.lt.s32.totalorder %s437, 63
      %s439 = scalar_select %p438, %s437, 63
      %s440 = smul.addr %s439, 8
      %s441 = scalar_lea.vmem %s3, %s440
      // Predicated region
      $region33: #{autoencoder_forward.5} parent=31 // pred_check
        %p442 = pneg %p100
      $region34: #{autoencoder_forward.5} parent=31 // pred_check_branch
        %444 = sbr.rel (%p442) target = $region36
      $region35: #{autoencoder_forward.5} parent=31 // pred_region
        %s445 = smul.u32 16, %s14
      $region36: #{autoencoder_forward.5} parent=31 // pred_fallthru
        _
    $region32: #{autoencoder_forward.5} parent=5 // pred_fallthru
      _
    %p446 = scmp.le.s32.totalorder 2, %s9
    // Predicated region
    $region37: #{autoencoder_forward.5} parent=5 // pred_check
      %p447 = pneg %p446
    $region38: #{autoencoder_forward.5} parent=5 // pred_check_branch
      %449 = sbr.rel (%p447) target = $region40
    $region39: #{autoencoder_forward.5} parent=5 // pred_region
      %s450 = ssub.s32 %s9, 2
      // Predicated region
      $region41: #{autoencoder_forward.5} parent=39 // pred_check
        %p451 = pneg %p106
      $region42: #{autoencoder_forward.5} parent=39 // pred_check_branch
        %453 = sbr.rel (%p451) target = $region44
      $region43: #{autoencoder_forward.5} parent=39 // pred_region
        %s454 = smul.u32 16, %s15
        %p455 = scmp.lt.s32.totalorder %s454, 63
        %s456 = scalar_select %p455, %s454, 63
        %s457 = smul.addr %s456, 8
        %s458 = scalar_lea.vmem %s3, %s457
      $region44: #{autoencoder_forward.5} parent=39 // pred_fallthru
        _
    $region40: #{autoencoder_forward.5} parent=5 // pred_fallthru
      _
  $region6: #{autoencoder_forward.5} parent=0 // loop_footer
    %s13 = sadd.s32 1, %s9
  $region7: #{autoencoder_forward.5} parent=0 // loop_footer_branch
    %8 = sbr.rel target = $region3
  $region8: #{autoencoder_forward.5} parent=0 // loop_exit
    _

// kernel: autoencoder_forward.6
$region0: #{autoencoder_forward.6}
  #allocation0 [shape = 'u32[]', space=smem, size = 0x4, offset = 0x4, fixed_abs, tag = 'smem constant byte address 0x4 - core index']
  #allocation1 [shape = 'u32[144,128]{1,0:T(1,128)}', space=vmem, size = 0x12000, scoped, tag = 'internal scratch']
  %s0 = inlined_call_operand.vmem [shape: f32[128,400], index: 0, kind: input, shape index: {}]
  %s1 = inlined_call_operand.vmem [shape: f32[400,128], index: 1, kind: input, shape index: {}]
  %s2 = inlined_call_operand.vmem [shape: f32[1,128], index: 2, kind: input, shape index: {}]
  %s3 = inlined_call_operand.vmem [shape: f32[128,128], index: 3, kind: output, shape index: {}]
  %s4 = sld [smem:[#allocation0]]
  $region22: #{autoencoder_forward.6} parent=0
    _
  %s6 = ssub.s32 1, %s4
  %s7 = scalar_select 0, %s6, %s4
  // Predicated region
  $region2: #{autoencoder_forward.6} parent=0 // pred_check
    _
  $region3: #{autoencoder_forward.6} parent=0 // pred_check_branch
    %9 = sbr.rel (0) target = $region5
  $region4: #{autoencoder_forward.6} parent=0 // pred_region
    _
  $region5: #{autoencoder_forward.6} parent=0 // pred_fallthru
    _
  // Predicated region
  $region6: #{autoencoder_forward.6} parent=0 // pred_check
    _
  $region7: #{autoencoder_forward.6} parent=0 // pred_check_branch
    %11 = sbr.rel (0) target = $region9
  $region8: #{autoencoder_forward.6} parent=0 // pred_region
    _
  $region9: #{autoencoder_forward.6} parent=0 // pred_fallthru
    _
  // Predicated region
  $region10: #{autoencoder_forward.6} parent=0 // pred_check
    _
  $region11: #{autoencoder_forward.6} parent=0 // pred_check_branch
    %13 = sbr.rel (0) target = $region13
  $region12: #{autoencoder_forward.6} parent=0 // pred_region
    _
  $region13: #{autoencoder_forward.6} parent=0 // pred_fallthru
    _
  %v14 = vld [vmem:[%s0] sm:$0xff]
  %v15 = vld [vmem:[%s0 + $0x8] sm:$0xff]
  %v16 = vld [vmem:[%s0 + $0x10] sm:$0xff]
  %v17 = vld [vmem:[%s0 + $0x18] sm:$0xff]
  %v18 = vld [vmem:[%s0 + $0x20] sm:$0xff]
  %v19 = vld [vmem:[%s0 + $0x28] sm:$0xff]
  %v20 = vld [vmem:[%s0 + $0x30] sm:$0xff]
  %v21 = vld [vmem:[%s0 + $0x38] sm:$0xff]
  %v22 = vld [vmem:[%s0 + $0x40] sm:$0xff]
  %v23 = vld [vmem:[%s0 + $0x48] sm:$0xff]
  %v24 = vld [vmem:[%s0 + $0x50] sm:$0xff]
  %v25 = vld [vmem:[%s0 + $0x58] sm:$0xff]
  %v26 = vld [vmem:[%s0 + $0x60] sm:$0xff]
  %v27 = vld [vmem:[%s0 + $0x68] sm:$0xff]
  %v28 = vld [vmem:[%s0 + $0x70] sm:$0xff]
  %v29 = vld [vmem:[%s0 + $0x78] sm:$0xff]
  %v30 = vld [vmem:[%s0 + $0x80] sm:$0xff]
  %v31 = vld [vmem:[%s0 + $0x88] sm:$0xff]
  %v32 = vld [vmem:[%s0 + $0x90] sm:$0xff]
  %v33 = vld [vmem:[%s0 + $0x98] sm:$0xff]
  %v34 = vld [vmem:[%s0 + $0xa0] sm:$0xff]
  %v35 = vld [vmem:[%s0 + $0xa8] sm:$0xff]
  %v36 = vld [vmem:[%s0 + $0xb0] sm:$0xff]
  %v37 = vld [vmem:[%s0 + $0xb8] sm:$0xff]
  %v38 = vld [vmem:[%s0 + $0xc0] sm:$0xff]
  %v39 = vld [vmem:[%s0 + $0xc8] sm:$0xff]
  %v40 = vld [vmem:[%s0 + $0xd0] sm:$0xff]
  %v41 = vld [vmem:[%s0 + $0xd8] sm:$0xff]
  %v42 = vld [vmem:[%s0 + $0xe0] sm:$0xff]
  %v43 = vld [vmem:[%s0 + $0xe8] sm:$0xff]
  %v44 = vld [vmem:[%s0 + $0xf0] sm:$0xff]
  %v45 = vld [vmem:[%s0 + $0xf8] sm:$0xff]
  %v46 = vld [vmem:[%s0 + $0x100] sm:$0xff]
  %v47 = vld [vmem:[%s0 + $0x108] sm:$0xff]
  %v48 = vld [vmem:[%s0 + $0x110] sm:$0xff]
  %v49 = vld [vmem:[%s0 + $0x118] sm:$0xff]
  %v50 = vld [vmem:[%s0 + $0x120] sm:$0xff]
  %v51 = vld [vmem:[%s0 + $0x128] sm:$0xff]
  %v52 = vld [vmem:[%s0 + $0x130] sm:$0xff]
  %v53 = vld [vmem:[%s0 + $0x138] sm:$0xff]
  %v54 = vld [vmem:[%s0 + $0x140] sm:$0xff]
  %v55 = vld [vmem:[%s0 + $0x148] sm:$0xff]
  %v56 = vld [vmem:[%s0 + $0x150] sm:$0xff]
  %v57 = vld [vmem:[%s0 + $0x158] sm:$0xff]
  %v58 = vld [vmem:[%s0 + $0x160] sm:$0xff]
  %v59 = vld [vmem:[%s0 + $0x168] sm:$0xff]
  %v60 = vld [vmem:[%s0 + $0x170] sm:$0xff]
  %v61 = vld [vmem:[%s0 + $0x178] sm:$0xff]
  %v62 = vld [vmem:[%s0 + $0x180] sm:$0xff]
  %v63 = vld [vmem:[%s0 + $0x188] sm:$0xff]
  %v64 = vld [vmem:[%s0 + $0x190] sm:$0xff]
  %v65 = vld [vmem:[%s0 + $0x198] sm:$0xff]
  %v66 = vld [vmem:[%s0 + $0x1a0] sm:$0xff]
  %v67 = vld [vmem:[%s0 + $0x1a8] sm:$0xff]
  %v68 = vld [vmem:[%s0 + $0x1b0] sm:$0xff]
  %v69 = vld [vmem:[%s0 + $0x1b8] sm:$0xff]
  %v70 = vld [vmem:[%s0 + $0x1c0] sm:$0xff]
  %v71 = vld [vmem:[%s0 + $0x1c8] sm:$0xff]
  %v72 = vld [vmem:[%s0 + $0x1d0] sm:$0xff]
  %v73 = vld [vmem:[%s0 + $0x1d8] sm:$0xff]
  %v74 = vld [vmem:[%s0 + $0x1e0] sm:$0xff]
  %v75 = vld [vmem:[%s0 + $0x1e8] sm:$0xff]
  %v76 = vld [vmem:[%s0 + $0x1f0] sm:$0xff]
  %v77 = vld [vmem:[%s0 + $0x1f8] sm:$0xff]
  %v78 = vld [vmem:[%s1] sm:$0xff]
  %v79 = vld [vmem:[%s1 + $0x8] sm:$0xff]
  %v80 = vld [vmem:[%s1 + $0x10] sm:$0xff]
  %v81 = vld [vmem:[%s1 + $0x18] sm:$0xff]
  %v82 = vld [vmem:[%s1 + $0x20] sm:$0xff]
  %v83 = vld [vmem:[%s1 + $0x28] sm:$0xff]
  %v84 = vld [vmem:[%s1 + $0x30] sm:$0xff]
  %v85 = vld [vmem:[%s1 + $0x38] sm:$0xff]
  %v86 = vld [vmem:[%s1 + $0x40] sm:$0xff]
  %v87 = vld [vmem:[%s1 + $0x48] sm:$0xff]
  %v88 = vld [vmem:[%s1 + $0x50] sm:$0xff]
  %v89 = vld [vmem:[%s1 + $0x58] sm:$0xff]
  %v90 = vld [vmem:[%s1 + $0x60] sm:$0xff]
  %v91 = vld [vmem:[%s1 + $0x68] sm:$0xff]
  %v92 = vld [vmem:[%s1 + $0x70] sm:$0xff]
  %v93 = vld [vmem:[%s1 + $0x78] sm:$0xff]
  %v94 = vld [vmem:[%s1 + $0x80] sm:$0xff]
  %v95 = vld [vmem:[%s1 + $0x88] sm:$0xff]
  %v96 = vld [vmem:[%s1 + $0x90] sm:$0xff]
  %v97 = vld [vmem:[%s1 + $0x98] sm:$0xff]
  %v98 = vld [vmem:[%s1 + $0xa0] sm:$0xff]
  %v99 = vld [vmem:[%s1 + $0xa8] sm:$0xff]
  %v100 = vld [vmem:[%s1 + $0xb0] sm:$0xff]
  %v101 = vld [vmem:[%s1 + $0xb8] sm:$0xff]
  %v102 = vld [vmem:[%s1 + $0xc0] sm:$0xff]
  %v103 = vld [vmem:[%s1 + $0xc8] sm:$0xff]
  %v104 = vld [vmem:[%s1 + $0xd0] sm:$0xff]
  %v105 = vld [vmem:[%s1 + $0xd8] sm:$0xff]
  %v106 = vld [vmem:[%s1 + $0xe0] sm:$0xff]
  %v107 = vld [vmem:[%s1 + $0xe8] sm:$0xff]
  %v108 = vld [vmem:[%s1 + $0xf0] sm:$0xff]
  %v109 = vld [vmem:[%s1 + $0xf8] sm:$0xff]
  %v110 = vld [vmem:[%s1 + $0x100] sm:$0xff]
  %v111 = vld [vmem:[%s1 + $0x108] sm:$0xff]
  %v112 = vld [vmem:[%s1 + $0x110] sm:$0xff]
  %v113 = vld [vmem:[%s1 + $0x118] sm:$0xff]
  %v114 = vld [vmem:[%s1 + $0x120] sm:$0xff]
  %v115 = vld [vmem:[%s1 + $0x128] sm:$0xff]
  %v116 = vld [vmem:[%s1 + $0x130] sm:$0xff]
  %v117 = vld [vmem:[%s1 + $0x138] sm:$0xff]
  %v118 = vld [vmem:[%s1 + $0x140] sm:$0xff]
  %v119 = vld [vmem:[%s1 + $0x148] sm:$0xff]
  %v120 = vld [vmem:[%s1 + $0x150] sm:$0xff]
  %v121 = vld [vmem:[%s1 + $0x158] sm:$0xff]
  %v122 = vld [vmem:[%s1 + $0x160] sm:$0xff]
  %v123 = vld [vmem:[%s1 + $0x168] sm:$0xff]
  %v124 = vld [vmem:[%s1 + $0x170] sm:$0xff]
  %v125 = vld [vmem:[%s1 + $0x178] sm:$0xff]
  %v126 = vld [vmem:[%s1 + $0x180] sm:$0xff]
  %v127 = vld [vmem:[%s1 + $0x188] sm:$0xff]
  %v128 = vld [vmem:[%s2] sm:$0x1]
  %v130 = vlaneseq
  %v131 = vshrl.u32 %v130, 7
  %v132 = vsub.s32 0, %v131
  %v133 = vrot.slane %v128, %v132
  %vm135 = vcmask 130048
  %v137 = vsel %vm135, %v17, 0
  %v140 = vsel %vm135, %v21, 0
  %v143 = vsel %vm135, %v25, 0
  %v146 = vsel %vm135, %v29, 0
  %v149 = vsel %vm135, %v33, 0
  %v152 = vsel %vm135, %v37, 0
  %v155 = vsel %vm135, %v41, 0
  %v158 = vsel %vm135, %v45, 0
  %v161 = vsel %vm135, %v49, 0
  %v164 = vsel %vm135, %v53, 0
  %v167 = vsel %vm135, %v57, 0
  %v170 = vsel %vm135, %v61, 0
  %v173 = vsel %vm135, %v65, 0
  %v176 = vsel %vm135, %v69, 0
  %v179 = vsel %vm135, %v73, 0
  %v182 = vsel %vm135, %v77, 0
  %184 = vmatprep.subr.mxu0 0.0
  %185 = vmatpush1.msra.mxu0 %v93
  %186 = vmatprep.subr.mxu0 0.0
  %187 = vmatpush1.msra.mxu0 %v92
  %188 = vmatprep.subr.mxu0 0.0
  %189 = vmatpush1.msra.mxu0 %v91
  %190 = vmatprep.subr.mxu0 0.0
  %191 = vmatpush1.msra.mxu0 %v90
  %192 = vmatprep.subr.mxu0 0.0
  %193 = vmatpush1.msra.mxu0 %v89
  %194 = vmatprep.subr.mxu0 0.0
  %195 = vmatpush1.msra.mxu0 %v88
  %196 = vmatprep.subr.mxu0 0.0
  %197 = vmatpush1.msra.mxu0 %v87
  %198 = vmatprep.subr.mxu0 0.0
  %199 = vmatpush1.msra.mxu0 %v86
  %200 = vmatprep.subr.mxu0 0.0
  %201 = vmatpush1.msra.mxu0 %v85
  %202 = vmatprep.subr.mxu0 0.0
  %203 = vmatpush1.msra.mxu0 %v84
  %204 = vmatprep.subr.mxu0 0.0
  %205 = vmatpush1.msra.mxu0 %v83
  %206 = vmatprep.subr.mxu0 0.0
  %207 = vmatpush1.msra.mxu0 %v82
  %208 = vmatprep.subr.mxu0 0.0
  %209 = vmatpush1.msra.mxu0 %v81
  %210 = vmatprep.subr.mxu0 0.0
  %211 = vmatpush1.msra.mxu0 %v80
  %212 = vmatprep.subr.mxu0 0.0
  %213 = vmatpush1.msra.mxu0 %v79
  %214 = vmatprep.subr.mxu0 0.0
  %215 = vmatpush1.msra.mxu0 %v78
  %216 = vmatprep.subr.mxu0 0.0
  %217 = vmatpush2.msra.mxu0 %v109
  %218 = vmatprep.subr.mxu0 0.0
  %219 = vmatpush2.msra.mxu0 %v108
  %220 = vmatprep.subr.mxu0 0.0
  %221 = vmatpush2.msra.mxu0 %v107
  %222 = vmatprep.subr.mxu0 0.0
  %223 = vmatpush2.msra.mxu0 %v106
  %224 = vmatprep.subr.mxu0 0.0
  %225 = vmatpush2.msra.mxu0 %v105
  %226 = vmatprep.subr.mxu0 0.0
  %227 = vmatpush2.msra.mxu0 %v104
  %228 = vmatprep.subr.mxu0 0.0
  %229 = vmatpush2.msra.mxu0 %v103
  %230 = vmatprep.subr.mxu0 0.0
  %231 = vmatpush2.msra.mxu0 %v102
  %232 = vmatprep.subr.mxu0 0.0
  %233 = vmatpush2.msra.mxu0 %v101
  %234 = vmatprep.subr.mxu0 0.0
  %235 = vmatpush2.msra.mxu0 %v100
  %236 = vmatprep.subr.mxu0 0.0
  %237 = vmatpush2.msra.mxu0 %v99
  %238 = vmatprep.subr.mxu0 0.0
  %239 = vmatpush2.msra.mxu0 %v98
  %240 = vmatprep.subr.mxu0 0.0
  %241 = vmatpush2.msra.mxu0 %v97
  %242 = vmatprep.subr.mxu0 0.0
  %243 = vmatpush2.msra.mxu0 %v96
  %244 = vmatprep.subr.mxu0 0.0
  %245 = vmatpush2.msra.mxu0 %v95
  %246 = vmatprep.subr.mxu0 0.0
  %247 = vmatpush2.msra.mxu0 %v94
  %248 = vmatprep.mubr.f32.mxu0 %v15
  %249 = vmatmul.mubr.f32.gmra.mxu0 %v14
  %v250 = vpop.f32.mrf.mxu0
  %v251 = vadd.f32 %v133, %v250
  %v252 = vpop.f32.mrf.mxu0
  %253 = vmatprep.mubr.f32.mxu0 %v19
  %254 = vmatmul.mubr.f32.gmra.mxu0 %v18
  %v255 = vpop.f32.mrf.mxu0
  %v256 = vadd.f32 %v133, %v255
  %v257 = vpop.f32.mrf.mxu0
  %258 = vmatprep.mubr.f32.mxu0 %v23
  %259 = vmatmul.mubr.f32.gmra.mxu0 %v22
  %v260 = vpop.f32.mrf.mxu0
  %v261 = vadd.f32 %v133, %v260
  %v262 = vpop.f32.mrf.mxu0
  %263 = vmatprep.mubr.f32.mxu0 %v27
  %264 = vmatmul.mubr.f32.gmra.mxu0 %v26
  %v265 = vpop.f32.mrf.mxu0
  %v266 = vadd.f32 %v133, %v265
  %v267 = vpop.f32.mrf.mxu0
  %268 = vmatprep.mubr.f32.mxu0 %v31
  %269 = vmatmul.mubr.f32.gmra.mxu0 %v30
  %v270 = vpop.f32.mrf.mxu0
  %v271 = vadd.f32 %v133, %v270
  %v272 = vpop.f32.mrf.mxu0
  %273 = vmatprep.mubr.f32.mxu0 %v35
  %274 = vmatmul.mubr.f32.gmra.mxu0 %v34
  %v275 = vpop.f32.mrf.mxu0
  %v276 = vadd.f32 %v133, %v275
  %v277 = vpop.f32.mrf.mxu0
  %278 = vmatprep.mubr.f32.mxu0 %v39
  %279 = vmatmul.mubr.f32.gmra.mxu0 %v38
  %v280 = vpop.f32.mrf.mxu0
  %v281 = vadd.f32 %v133, %v280
  %v282 = vpop.f32.mrf.mxu0
  %283 = vmatprep.mubr.f32.mxu0 %v43
  %284 = vmatmul.mubr.f32.gmra.mxu0 %v42
  %v285 = vpop.f32.mrf.mxu0
  %v286 = vadd.f32 %v133, %v285
  %v287 = vpop.f32.mrf.mxu0
  %288 = vmatprep.mubr.f32.mxu0 %v47
  %289 = vmatmul.mubr.f32.gmra.mxu0 %v46
  %v290 = vpop.f32.mrf.mxu0
  %v291 = vadd.f32 %v133, %v290
  %v292 = vpop.f32.mrf.mxu0
  %293 = vmatprep.mubr.f32.mxu0 %v51
  %294 = vmatmul.mubr.f32.gmra.mxu0 %v50
  %v295 = vpop.f32.mrf.mxu0
  %v296 = vadd.f32 %v133, %v295
  %v297 = vpop.f32.mrf.mxu0
  %298 = vmatprep.mubr.f32.mxu0 %v55
  %299 = vmatmul.mubr.f32.gmra.mxu0 %v54
  %v300 = vpop.f32.mrf.mxu0
  %v301 = vadd.f32 %v133, %v300
  %v302 = vpop.f32.mrf.mxu0
  %303 = vmatprep.mubr.f32.mxu0 %v59
  %304 = vmatmul.mubr.f32.gmra.mxu0 %v58
  %v305 = vpop.f32.mrf.mxu0
  %v306 = vadd.f32 %v133, %v305
  %v307 = vpop.f32.mrf.mxu0
  %308 = vmatprep.mubr.f32.mxu0 %v63
  %309 = vmatmul.mubr.f32.gmra.mxu0 %v62
  %v310 = vpop.f32.mrf.mxu0
  %v311 = vadd.f32 %v133, %v310
  %v312 = vpop.f32.mrf.mxu0
  %313 = vmatprep.mubr.f32.mxu0 %v67
  %314 = vmatmul.mubr.f32.gmra.mxu0 %v66
  %v315 = vpop.f32.mrf.mxu0
  %v316 = vadd.f32 %v133, %v315
  %v317 = vpop.f32.mrf.mxu0
  %318 = vmatprep.mubr.f32.mxu0 %v71
  %319 = vmatmul.mubr.f32.gmra.mxu0 %v70
  %v320 = vpop.f32.mrf.mxu0
  %v321 = vadd.f32 %v133, %v320
  %v322 = vpop.f32.mrf.mxu0
  %323 = vmatprep.mubr.f32.mxu0 %v75
  %324 = vmatmul.mubr.f32.gmra.mxu0 %v74
  %v325 = vpop.f32.mrf.mxu0
  %v326 = vadd.f32 %v133, %v325
  %v327 = vpop.f32.mrf.mxu0
  %328 = vdwg.mxu0
  %329 = vmatprep.subr.mxu0 0.0
  %330 = vmatpush1.msra.mxu0 %v125
  %331 = vmatprep.subr.mxu0 0.0
  %332 = vmatpush1.msra.mxu0 %v124
  %333 = vmatprep.subr.mxu0 0.0
  %334 = vmatpush1.msra.mxu0 %v123
  %335 = vmatprep.subr.mxu0 0.0
  %336 = vmatpush1.msra.mxu0 %v122
  %337 = vmatprep.subr.mxu0 0.0
  %338 = vmatpush1.msra.mxu0 %v121
  %339 = vmatprep.subr.mxu0 0.0
  %340 = vmatpush1.msra.mxu0 %v120
  %341 = vmatprep.subr.mxu0 0.0
  %342 = vmatpush1.msra.mxu0 %v119
  %343 = vmatprep.subr.mxu0 0.0
  %344 = vmatpush1.msra.mxu0 %v118
  %345 = vmatprep.subr.mxu0 0.0
  %346 = vmatpush1.msra.mxu0 %v117
  %347 = vmatprep.subr.mxu0 0.0
  %348 = vmatpush1.msra.mxu0 %v116
  %349 = vmatprep.subr.mxu0 0.0
  %350 = vmatpush1.msra.mxu0 %v115
  %351 = vmatprep.subr.mxu0 0.0
  %352 = vmatpush1.msra.mxu0 %v114
  %353 = vmatprep.subr.mxu0 0.0
  %354 = vmatpush1.msra.mxu0 %v113
  %355 = vmatprep.subr.mxu0 0.0
  %356 = vmatpush1.msra.mxu0 %v112
  %357 = vmatprep.subr.mxu0 0.0
  %358 = vmatpush1.msra.mxu0 %v111
  %359 = vmatprep.subr.mxu0 0.0
  %360 = vmatpush1.msra.mxu0 %v110
  %361 = vmatprep.subr.mxu0 0.0
  %362 = vmatpush2.msra.mxu0 0.0
  %363 = vmatprep.subr.mxu0 0.0
  %364 = vmatpush2.msra.mxu0 0.0
  %365 = vmatprep.subr.mxu0 0.0
  %366 = vmatpush2.msra.mxu0 0.0
  %367 = vmatprep.subr.mxu0 0.0
  %368 = vmatpush2.msra.mxu0 0.0
  %369 = vmatprep.subr.mxu0 0.0
  %370 = vmatpush2.msra.mxu0 0.0
  %371 = vmatprep.subr.mxu0 0.0
  %372 = vmatpush2.msra.mxu0 0.0
  %373 = vmatprep.subr.mxu0 0.0
  %374 = vmatpush2.msra.mxu0 0.0
  %375 = vmatprep.subr.mxu0 0.0
  %376 = vmatpush2.msra.mxu0 0.0
  %377 = vmatprep.subr.mxu0 0.0
  %378 = vmatpush2.msra.mxu0 0.0
  %379 = vmatprep.subr.mxu0 0.0
  %380 = vmatpush2.msra.mxu0 0.0
  %381 = vmatprep.subr.mxu0 0.0
  %382 = vmatpush2.msra.mxu0 0.0
  %383 = vmatprep.subr.mxu0 0.0
  %384 = vmatpush2.msra.mxu0 0.0
  %385 = vmatprep.subr.mxu0 0.0
  %386 = vmatpush2.msra.mxu0 0.0
  %387 = vmatprep.subr.mxu0 0.0
  %388 = vmatpush2.msra.mxu0 0.0
  %389 = vmatprep.subr.mxu0 0.0
  %390 = vmatpush2.msra.mxu0 %v127
  %391 = vmatprep.subr.mxu0 0.0
  %392 = vmatpush2.msra.mxu0 %v126
  %393 = vmatprep.mubr.f32.mxu0 %v137
  %394 = vmatmul.mubr.f32.gmra.mxu0 %v16
  %v395 = vpop.f32.mrf.mxu0
  %v396 = vadd.f32 %v251, %v395
  %v397 = vpop.f32.mrf.mxu0
  %398 = vmatprep.mubr.f32.mxu0 %v140
  %399 = vmatmul.mubr.f32.gmra.mxu0 %v20
  %v400 = vpop.f32.mrf.mxu0
  %v401 = vadd.f32 %v256, %v400
  %v402 = vpop.f32.mrf.mxu0
  %403 = vmatprep.mubr.f32.mxu0 %v143
  %404 = vmatmul.mubr.f32.gmra.mxu0 %v24
  %v405 = vpop.f32.mrf.mxu0
  %v406 = vadd.f32 %v261, %v405
  %v407 = vpop.f32.mrf.mxu0
  %408 = vmatprep.mubr.f32.mxu0 %v146
  %409 = vmatmul.mubr.f32.gmra.mxu0 %v28
  %v410 = vpop.f32.mrf.mxu0
  %v411 = vadd.f32 %v266, %v410
  %v412 = vpop.f32.mrf.mxu0
  %413 = vmatprep.mubr.f32.mxu0 %v149
  %414 = vmatmul.mubr.f32.gmra.mxu0 %v32
  %v415 = vpop.f32.mrf.mxu0
  %v416 = vadd.f32 %v271, %v415
  %v417 = vpop.f32.mrf.mxu0
  %418 = vmatprep.mubr.f32.mxu0 %v152
  %419 = vmatmul.mubr.f32.gmra.mxu0 %v36
  %v420 = vpop.f32.mrf.mxu0
  %v421 = vadd.f32 %v276, %v420
  %v422 = vpop.f32.mrf.mxu0
  %423 = vmatprep.mubr.f32.mxu0 %v155
  %424 = vmatmul.mubr.f32.gmra.mxu0 %v40
  %v425 = vpop.f32.mrf.mxu0
  %v426 = vadd.f32 %v281, %v425
  %v427 = vpop.f32.mrf.mxu0
  %428 = vmatprep.mubr.f32.mxu0 %v158
  %429 = vmatmul.mubr.f32.gmra.mxu0 %v44
  %v430 = vpop.f32.mrf.mxu0
  %v431 = vadd.f32 %v286, %v430
  %v432 = vpop.f32.mrf.mxu0
  %433 = vmatprep.mubr.f32.mxu0 %v161
  %434 = vmatmul.mubr.f32.gmra.mxu0 %v48
  %v435 = vpop.f32.mrf.mxu0
  %v436 = vadd.f32 %v291, %v435
  %v437 = vpop.f32.mrf.mxu0
  %438 = vmatprep.mubr.f32.mxu0 %v164
  %439 = vmatmul.mubr.f32.gmra.mxu0 %v52
  %v440 = vpop.f32.mrf.mxu0
  %v441 = vadd.f32 %v296, %v440
  %v442 = vpop.f32.mrf.mxu0
  %443 = vmatprep.mubr.f32.mxu0 %v167
  %444 = vmatmul.mubr.f32.gmra.mxu0 %v56
  %v445 = vpop.f32.mrf.mxu0
  %v446 = vadd.f32 %v301, %v445
  %v447 = vpop.f32.mrf.mxu0
  %448 = vmatprep.mubr.f32.mxu0 %v170
  %449 = vmatmul.mubr.f32.gmra.mxu0 %v60
  %v450 = vpop.f32.mrf.mxu0
  %v451 = vadd.f32 %v306, %v450
  %v452 = vpop.f32.mrf.mxu0
  %453 = vmatprep.mubr.f32.mxu0 %v173
  %454 = vmatmul.mubr.f32.gmra.mxu0 %v64
  %v455 = vpop.f32.mrf.mxu0
  %v456 = vadd.f32 %v311, %v455
  %v457 = vpop.f32.mrf.mxu0
  %458 = vmatprep.mubr.f32.mxu0 %v176
  %459 = vmatmul.mubr.f32.gmra.mxu0 %v68
  %v460 = vpop.f32.mrf.mxu0
  %v461 = vadd.f32 %v316, %v460
  %v462 = vpop.f32.mrf.mxu0
  %463 = vmatprep.mubr.f32.mxu0 %v179
  %464 = vmatmul.mubr.f32.gmra.mxu0 %v72
  %v465 = vpop.f32.mrf.mxu0
  %v466 = vadd.f32 %v321, %v465
  %v467 = vpop.f32.mrf.mxu0
  %468 = vmatprep.mubr.f32.mxu0 %v182
  %469 = vmatmul.mubr.f32.gmra.mxu0 %v76
  %v470 = vpop.f32.mrf.mxu0
  %v471 = vadd.f32 %v326, %v470
  %v472 = vpop.f32.mrf.mxu0
  %473 = vdwg.mxu0
  %v474 = vmax.f32 %v396, 0.0
  %v475 = vmax.f32 %v401, 0.0
  %v476 = vmax.f32 %v406, 0.0
  %v477 = vmax.f32 %v411, 0.0
  %v478 = vmax.f32 %v416, 0.0
  %v479 = vmax.f32 %v421, 0.0
  %v480 = vmax.f32 %v426, 0.0
  %v481 = vmax.f32 %v431, 0.0
  %v482 = vmax.f32 %v436, 0.0
  %v483 = vmax.f32 %v441, 0.0
  %v484 = vmax.f32 %v446, 0.0
  %v485 = vmax.f32 %v451, 0.0
  %v486 = vmax.f32 %v456, 0.0
  %v487 = vmax.f32 %v461, 0.0
  %v488 = vmax.f32 %v466, 0.0
  %v489 = vmax.f32 %v471, 0.0
  %490 = vst [vmem:[%s3] sm:$0xff] %v474
  %491 = vst [vmem:[%s3 + $0x8] sm:$0xff] %v475
  %492 = vst [vmem:[%s3 + $0x10] sm:$0xff] %v476
  %493 = vst [vmem:[%s3 + $0x18] sm:$0xff] %v477
  %494 = vst [vmem:[%s3 + $0x20] sm:$0xff] %v478
  %495 = vst [vmem:[%s3 + $0x28] sm:$0xff] %v479
  %496 = vst [vmem:[%s3 + $0x30] sm:$0xff] %v480
  %497 = vst [vmem:[%s3 + $0x38] sm:$0xff] %v481
  %498 = vst [vmem:[%s3 + $0x40] sm:$0xff] %v482
  %499 = vst [vmem:[%s3 + $0x48] sm:$0xff] %v483
  %500 = vst [vmem:[%s3 + $0x50] sm:$0xff] %v484
  %501 = vst [vmem:[%s3 + $0x58] sm:$0xff] %v485
  %502 = vst [vmem:[%s3 + $0x60] sm:$0xff] %v486
  %503 = vst [vmem:[%s3 + $0x68] sm:$0xff] %v487
  %504 = vst [vmem:[%s3 + $0x70] sm:$0xff] %v488
  %505 = vst [vmem:[%s3 + $0x78] sm:$0xff] %v489
  // Predicated region
  $region14: #{autoencoder_forward.6} parent=0 // pred_check
    _
  $region15: #{autoencoder_forward.6} parent=0 // pred_check_branch
    %507 = sbr.rel (0) target = $region17
  $region16: #{autoencoder_forward.6} parent=0 // pred_region
    _
  $region17: #{autoencoder_forward.6} parent=0 // pred_fallthru
    _
  // Predicated region
  $region18: #{autoencoder_forward.6} parent=0 // pred_check
    _
  $region19: #{autoencoder_forward.6} parent=0 // pred_check_branch
    %509 = sbr.rel (0) target = $region21
  $region20: #{autoencoder_forward.6} parent=0 // pred_region
    _
  $region21: #{autoencoder_forward.6} parent=0 // pred_fallthru
    _

// kernel: autoencoder_forward.7
$region0: #{autoencoder_forward.7}
  #allocation0 [shape = 'u32[]', space=smem, size = 0x4, offset = 0x4, fixed_abs, tag = 'smem constant byte address 0x4 - core index']
  #allocation1 [shape = 'u32[144,128]{1,0:T(1,128)}', space=vmem, size = 0x12000, scoped, tag = 'internal scratch']
  %s0 = inlined_call_operand.vmem [shape: f32[128,72], index: 0, kind: input, shape index: {}]
  %s1 = inlined_call_operand.vmem [shape: f32[72,128], index: 1, kind: input, shape index: {}]
  %s2 = inlined_call_operand.vmem [shape: f32[1,128], index: 2, kind: input, shape index: {}]
  %s3 = inlined_call_operand.vmem [shape: f32[128,128], index: 3, kind: output, shape index: {}]
  %s4 = sld [smem:[#allocation0]]
  $region22: #{autoencoder_forward.7} parent=0
    _
  %s6 = ssub.s32 1, %s4
  %s7 = scalar_select 0, %s6, %s4
  // Predicated region
  $region2: #{autoencoder_forward.7} parent=0 // pred_check
    _
  $region3: #{autoencoder_forward.7} parent=0 // pred_check_branch
    %9 = sbr.rel (0) target = $region5
  $region4: #{autoencoder_forward.7} parent=0 // pred_region
    _
  $region5: #{autoencoder_forward.7} parent=0 // pred_fallthru
    _
  // Predicated region
  $region6: #{autoencoder_forward.7} parent=0 // pred_check
    _
  $region7: #{autoencoder_forward.7} parent=0 // pred_check_branch
    %11 = sbr.rel (0) target = $region9
  $region8: #{autoencoder_forward.7} parent=0 // pred_region
    _
  $region9: #{autoencoder_forward.7} parent=0 // pred_fallthru
    _
  // Predicated region
  $region10: #{autoencoder_forward.7} parent=0 // pred_check
    _
  $region11: #{autoencoder_forward.7} parent=0 // pred_check_branch
    %13 = sbr.rel (0) target = $region13
  $region12: #{autoencoder_forward.7} parent=0 // pred_region
    _
  $region13: #{autoencoder_forward.7} parent=0 // pred_fallthru
    _
  %v14 = vld [vmem:[%s0] sm:$0xff]
  %v15 = vld [vmem:[%s0 + $0x8] sm:$0xff]
  %v16 = vld [vmem:[%s0 + $0x10] sm:$0xff]
  %v17 = vld [vmem:[%s0 + $0x18] sm:$0xff]
  %v18 = vld [vmem:[%s0 + $0x20] sm:$0xff]
  %v19 = vld [vmem:[%s0 + $0x28] sm:$0xff]
  %v20 = vld [vmem:[%s0 + $0x30] sm:$0xff]
  %v21 = vld [vmem:[%s0 + $0x38] sm:$0xff]
  %v22 = vld [vmem:[%s0 + $0x40] sm:$0xff]
  %v23 = vld [vmem:[%s0 + $0x48] sm:$0xff]
  %v24 = vld [vmem:[%s0 + $0x50] sm:$0xff]
  %v25 = vld [vmem:[%s0 + $0x58] sm:$0xff]
  %v26 = vld [vmem:[%s0 + $0x60] sm:$0xff]
  %v27 = vld [vmem:[%s0 + $0x68] sm:$0xff]
  %v28 = vld [vmem:[%s0 + $0x70] sm:$0xff]
  %v29 = vld [vmem:[%s0 + $0x78] sm:$0xff]
  %v30 = vld [vmem:[%s1] sm:$0xff]
  %v31 = vld [vmem:[%s1 + $0x8] sm:$0xff]
  %v32 = vld [vmem:[%s1 + $0x10] sm:$0xff]
  %v33 = vld [vmem:[%s1 + $0x18] sm:$0xff]
  %v34 = vld [vmem:[%s1 + $0x20] sm:$0xff]
  %v35 = vld [vmem:[%s1 + $0x28] sm:$0xff]
  %v36 = vld [vmem:[%s1 + $0x30] sm:$0xff]
  %v37 = vld [vmem:[%s1 + $0x38] sm:$0xff]
  %v38 = vld [vmem:[%s1 + $0x40] sm:$0xff]
  %v39 = vld [vmem:[%s2] sm:$0x1]
  %v41 = vlaneseq
  %v42 = vshrl.u32 %v41, 7
  %v43 = vsub.s32 0, %v42
  %v44 = vrot.slane %v39, %v43
  %vm46 = vcmask 588800
  %v48 = vsel %vm46, %v14, 0
  %v51 = vsel %vm46, %v15, 0
  %v54 = vsel %vm46, %v16, 0
  %v57 = vsel %vm46, %v17, 0
  %v60 = vsel %vm46, %v18, 0
  %v63 = vsel %vm46, %v19, 0
  %v66 = vsel %vm46, %v20, 0
  %v69 = vsel %vm46, %v21, 0
  %v72 = vsel %vm46, %v22, 0
  %v75 = vsel %vm46, %v23, 0
  %v78 = vsel %vm46, %v24, 0
  %v81 = vsel %vm46, %v25, 0
  %v84 = vsel %vm46, %v26, 0
  %v87 = vsel %vm46, %v27, 0
  %v90 = vsel %vm46, %v28, 0
  %v93 = vsel %vm46, %v29, 0
  %95 = vmatprep.subr.mxu0 0.0
  %96 = vmatpush1.msra.mxu0 0.0
  %97 = vmatprep.subr.mxu0 0.0
  %98 = vmatpush1.msra.mxu0 0.0
  %99 = vmatprep.subr.mxu0 0.0
  %100 = vmatpush1.msra.mxu0 0.0
  %101 = vmatprep.subr.mxu0 0.0
  %102 = vmatpush1.msra.mxu0 0.0
  %103 = vmatprep.subr.mxu0 0.0
  %104 = vmatpush1.msra.mxu0 0.0
  %105 = vmatprep.subr.mxu0 0.0
  %106 = vmatpush1.msra.mxu0 0.0
  %107 = vmatprep.subr.mxu0 0.0
  %108 = vmatpush1.msra.mxu0 0.0
  %109 = vmatprep.subr.mxu0 0.0
  %110 = vmatpush1.msra.mxu0 %v38
  %111 = vmatprep.subr.mxu0 0.0
  %112 = vmatpush1.msra.mxu0 %v37
  %113 = vmatprep.subr.mxu0 0.0
  %114 = vmatpush1.msra.mxu0 %v36
  %115 = vmatprep.subr.mxu0 0.0
  %116 = vmatpush1.msra.mxu0 %v35
  %117 = vmatprep.subr.mxu0 0.0
  %118 = vmatpush1.msra.mxu0 %v34
  %119 = vmatprep.subr.mxu0 0.0
  %120 = vmatpush1.msra.mxu0 %v33
  %121 = vmatprep.subr.mxu0 0.0
  %122 = vmatpush1.msra.mxu0 %v32
  %123 = vmatprep.subr.mxu0 0.0
  %124 = vmatpush1.msra.mxu0 %v31
  %125 = vmatprep.subr.mxu0 0.0
  %126 = vmatpush1.msra.mxu0 %v30
  %127 = vmatprep.subr.mxu0 0.0
  %128 = vmatpush2.msra.mxu0 0.0
  %129 = vmatprep.subr.mxu0 0.0
  %130 = vmatpush2.msra.mxu0 0.0
  %131 = vmatprep.subr.mxu0 0.0
  %132 = vmatpush2.msra.mxu0 0.0
  %133 = vmatprep.subr.mxu0 0.0
  %134 = vmatpush2.msra.mxu0 0.0
  %135 = vmatprep.subr.mxu0 0.0
  %136 = vmatpush2.msra.mxu0 0.0
  %137 = vmatprep.subr.mxu0 0.0
  %138 = vmatpush2.msra.mxu0 0.0
  %139 = vmatprep.subr.mxu0 0.0
  %140 = vmatpush2.msra.mxu0 0.0
  %141 = vmatprep.subr.mxu0 0.0
  %142 = vmatpush2.msra.mxu0 0.0
  %143 = vmatprep.subr.mxu0 0.0
  %144 = vmatpush2.msra.mxu0 0.0
  %145 = vmatprep.subr.mxu0 0.0
  %146 = vmatpush2.msra.mxu0 0.0
  %147 = vmatprep.subr.mxu0 0.0
  %148 = vmatpush2.msra.mxu0 0.0
  %149 = vmatprep.subr.mxu0 0.0
  %150 = vmatpush2.msra.mxu0 0.0
  %151 = vmatprep.subr.mxu0 0.0
  %152 = vmatpush2.msra.mxu0 0.0
  %153 = vmatprep.subr.mxu0 0.0
  %154 = vmatpush2.msra.mxu0 0.0
  %155 = vmatprep.subr.mxu0 0.0
  %156 = vmatpush2.msra.mxu0 0.0
  %157 = vmatprep.subr.mxu0 0.0
  %158 = vmatpush2.msra.mxu0 0.0
  %159 = vmatprep.mubr.f32.mxu0 0.0
  %160 = vmatmul.mubr.f32.gmra.mxu0 %v48
  %v161 = vpop.f32.mrf.mxu0
  %v162 = vadd.f32 %v44, %v161
  %v163 = vpop.f32.mrf.mxu0
  %164 = vmatprep.mubr.f32.mxu0 0.0
  %165 = vmatmul.mubr.f32.gmra.mxu0 %v51
  %v166 = vpop.f32.mrf.mxu0
  %v167 = vadd.f32 %v44, %v166
  %v168 = vpop.f32.mrf.mxu0
  %169 = vmatprep.mubr.f32.mxu0 0.0
  %170 = vmatmul.mubr.f32.gmra.mxu0 %v54
  %v171 = vpop.f32.mrf.mxu0
  %v172 = vadd.f32 %v44, %v171
  %v173 = vpop.f32.mrf.mxu0
  %174 = vmatprep.mubr.f32.mxu0 0.0
  %175 = vmatmul.mubr.f32.gmra.mxu0 %v57
  %v176 = vpop.f32.mrf.mxu0
  %v177 = vadd.f32 %v44, %v176
  %v178 = vpop.f32.mrf.mxu0
  %179 = vmatprep.mubr.f32.mxu0 0.0
  %180 = vmatmul.mubr.f32.gmra.mxu0 %v60
  %v181 = vpop.f32.mrf.mxu0
  %v182 = vadd.f32 %v44, %v181
  %v183 = vpop.f32.mrf.mxu0
  %184 = vmatprep.mubr.f32.mxu0 0.0
  %185 = vmatmul.mubr.f32.gmra.mxu0 %v63
  %v186 = vpop.f32.mrf.mxu0
  %v187 = vadd.f32 %v44, %v186
  %v188 = vpop.f32.mrf.mxu0
  %189 = vmatprep.mubr.f32.mxu0 0.0
  %190 = vmatmul.mubr.f32.gmra.mxu0 %v66
  %v191 = vpop.f32.mrf.mxu0
  %v192 = vadd.f32 %v44, %v191
  %v193 = vpop.f32.mrf.mxu0
  %194 = vmatprep.mubr.f32.mxu0 0.0
  %195 = vmatmul.mubr.f32.gmra.mxu0 %v69
  %v196 = vpop.f32.mrf.mxu0
  %v197 = vadd.f32 %v44, %v196
  %v198 = vpop.f32.mrf.mxu0
  %199 = vmatprep.mubr.f32.mxu0 0.0
  %200 = vmatmul.mubr.f32.gmra.mxu0 %v72
  %v201 = vpop.f32.mrf.mxu0
  %v202 = vadd.f32 %v44, %v201
  %v203 = vpop.f32.mrf.mxu0
  %204 = vmatprep.mubr.f32.mxu0 0.0
  %205 = vmatmul.mubr.f32.gmra.mxu0 %v75
  %v206 = vpop.f32.mrf.mxu0
  %v207 = vadd.f32 %v44, %v206
  %v208 = vpop.f32.mrf.mxu0
  %209 = vmatprep.mubr.f32.mxu0 0.0
  %210 = vmatmul.mubr.f32.gmra.mxu0 %v78
  %v211 = vpop.f32.mrf.mxu0
  %v212 = vadd.f32 %v44, %v211
  %v213 = vpop.f32.mrf.mxu0
  %214 = vmatprep.mubr.f32.mxu0 0.0
  %215 = vmatmul.mubr.f32.gmra.mxu0 %v81
  %v216 = vpop.f32.mrf.mxu0
  %v217 = vadd.f32 %v44, %v216
  %v218 = vpop.f32.mrf.mxu0
  %219 = vmatprep.mubr.f32.mxu0 0.0
  %220 = vmatmul.mubr.f32.gmra.mxu0 %v84
  %v221 = vpop.f32.mrf.mxu0
  %v222 = vadd.f32 %v44, %v221
  %v223 = vpop.f32.mrf.mxu0
  %224 = vmatprep.mubr.f32.mxu0 0.0
  %225 = vmatmul.mubr.f32.gmra.mxu0 %v87
  %v226 = vpop.f32.mrf.mxu0
  %v227 = vadd.f32 %v44, %v226
  %v228 = vpop.f32.mrf.mxu0
  %229 = vmatprep.mubr.f32.mxu0 0.0
  %230 = vmatmul.mubr.f32.gmra.mxu0 %v90
  %v231 = vpop.f32.mrf.mxu0
  %v232 = vadd.f32 %v44, %v231
  %v233 = vpop.f32.mrf.mxu0
  %234 = vmatprep.mubr.f32.mxu0 0.0
  %235 = vmatmul.mubr.f32.gmra.mxu0 %v93
  %v236 = vpop.f32.mrf.mxu0
  %v237 = vadd.f32 %v44, %v236
  %v238 = vpop.f32.mrf.mxu0
  %239 = vdwg.mxu0
  %v240 = vmax.f32 %v162, 0.0
  %v241 = vmax.f32 %v167, 0.0
  %v242 = vmax.f32 %v172, 0.0
  %v243 = vmax.f32 %v177, 0.0
  %v244 = vmax.f32 %v182, 0.0
  %v245 = vmax.f32 %v187, 0.0
  %v246 = vmax.f32 %v192, 0.0
  %v247 = vmax.f32 %v197, 0.0
  %v248 = vmax.f32 %v202, 0.0
  %v249 = vmax.f32 %v207, 0.0
  %v250 = vmax.f32 %v212, 0.0
  %v251 = vmax.f32 %v217, 0.0
  %v252 = vmax.f32 %v222, 0.0
  %v253 = vmax.f32 %v227, 0.0
  %v254 = vmax.f32 %v232, 0.0
  %v255 = vmax.f32 %v237, 0.0
  %256 = vst [vmem:[%s3] sm:$0xff] %v240
  %257 = vst [vmem:[%s3 + $0x8] sm:$0xff] %v241
  %258 = vst [vmem:[%s3 + $0x10] sm:$0xff] %v242
  %259 = vst [vmem:[%s3 + $0x18] sm:$0xff] %v243
  %260 = vst [vmem:[%s3 + $0x20] sm:$0xff] %v244
  %261 = vst [vmem:[%s3 + $0x28] sm:$0xff] %v245
  %262 = vst [vmem:[%s3 + $0x30] sm:$0xff] %v246
  %263 = vst [vmem:[%s3 + $0x38] sm:$0xff] %v247
  %264 = vst [vmem:[%s3 + $0x40] sm:$0xff] %v248
  %265 = vst [vmem:[%s3 + $0x48] sm:$0xff] %v249
  %266 = vst [vmem:[%s3 + $0x50] sm:$0xff] %v250
  %267 = vst [vmem:[%s3 + $0x58] sm:$0xff] %v251
  %268 = vst [vmem:[%s3 + $0x60] sm:$0xff] %v252
  %269 = vst [vmem:[%s3 + $0x68] sm:$0xff] %v253
  %270 = vst [vmem:[%s3 + $0x70] sm:$0xff] %v254
  %271 = vst [vmem:[%s3 + $0x78] sm:$0xff] %v255
  // Predicated region
  $region14: #{autoencoder_forward.7} parent=0 // pred_check
    _
  $region15: #{autoencoder_forward.7} parent=0 // pred_check_branch
    %273 = sbr.rel (0) target = $region17
  $region16: #{autoencoder_forward.7} parent=0 // pred_region
    _
  $region17: #{autoencoder_forward.7} parent=0 // pred_fallthru
    _
  // Predicated region
  $region18: #{autoencoder_forward.7} parent=0 // pred_check
    _
  $region19: #{autoencoder_forward.7} parent=0 // pred_check_branch
    %275 = sbr.rel (0) target = $region21
  $region20: #{autoencoder_forward.7} parent=0 // pred_region
    _
  $region21: #{autoencoder_forward.7} parent=0 // pred_fallthru
    _

// kernel: autoencoder_forward.8
$region0: #{autoencoder_forward.8}
  #allocation0 [shape = 'u32[]', space=smem, size = 0x4, offset = 0x4, fixed_abs, tag = 'smem constant byte address 0x4 - core index']
  #allocation1 [shape = 'u32[144,128]{1,0:T(1,128)}', space=vmem, size = 0x12000, scoped, tag = 'internal scratch']
  %s0 = inlined_call_operand.vmem [shape: f32[128,144], index: 0, kind: input, shape index: {}]
  %s1 = inlined_call_operand.vmem [shape: f32[144,128], index: 1, kind: input, shape index: {}]
  %s2 = inlined_call_operand.vmem [shape: f32[1,128], index: 2, kind: input, shape index: {}]
  %s3 = inlined_call_operand.vmem [shape: f32[128,128], index: 3, kind: output, shape index: {}]
  %s4 = sld [smem:[#allocation0]]
  $region22: #{autoencoder_forward.8} parent=0
    _
  %s6 = ssub.s32 1, %s4
  %s7 = scalar_select 0, %s6, %s4
  // Predicated region
  $region2: #{autoencoder_forward.8} parent=0 // pred_check
    _
  $region3: #{autoencoder_forward.8} parent=0 // pred_check_branch
    %9 = sbr.rel (0) target = $region5
  $region4: #{autoencoder_forward.8} parent=0 // pred_region
    _
  $region5: #{autoencoder_forward.8} parent=0 // pred_fallthru
    _
  // Predicated region
  $region6: #{autoencoder_forward.8} parent=0 // pred_check
    _
  $region7: #{autoencoder_forward.8} parent=0 // pred_check_branch
    %11 = sbr.rel (0) target = $region9
  $region8: #{autoencoder_forward.8} parent=0 // pred_region
    _
  $region9: #{autoencoder_forward.8} parent=0 // pred_fallthru
    _
  // Predicated region
  $region10: #{autoencoder_forward.8} parent=0 // pred_check
    _
  $region11: #{autoencoder_forward.8} parent=0 // pred_check_branch
    %13 = sbr.rel (0) target = $region13
  $region12: #{autoencoder_forward.8} parent=0 // pred_region
    _
  $region13: #{autoencoder_forward.8} parent=0 // pred_fallthru
    _
  %v14 = vld [vmem:[%s0] sm:$0xff]
  %v15 = vld [vmem:[%s0 + $0x8] sm:$0xff]
  %v16 = vld [vmem:[%s0 + $0x10] sm:$0xff]
  %v17 = vld [vmem:[%s0 + $0x18] sm:$0xff]
  %v18 = vld [vmem:[%s0 + $0x20] sm:$0xff]
  %v19 = vld [vmem:[%s0 + $0x28] sm:$0xff]
  %v20 = vld [vmem:[%s0 + $0x30] sm:$0xff]
  %v21 = vld [vmem:[%s0 + $0x38] sm:$0xff]
  %v22 = vld [vmem:[%s0 + $0x40] sm:$0xff]
  %v23 = vld [vmem:[%s0 + $0x48] sm:$0xff]
  %v24 = vld [vmem:[%s0 + $0x50] sm:$0xff]
  %v25 = vld [vmem:[%s0 + $0x58] sm:$0xff]
  %v26 = vld [vmem:[%s0 + $0x60] sm:$0xff]
  %v27 = vld [vmem:[%s0 + $0x68] sm:$0xff]
  %v28 = vld [vmem:[%s0 + $0x70] sm:$0xff]
  %v29 = vld [vmem:[%s0 + $0x78] sm:$0xff]
  %v30 = vld [vmem:[%s0 + $0x80] sm:$0xff]
  %v31 = vld [vmem:[%s0 + $0x88] sm:$0xff]
  %v32 = vld [vmem:[%s0 + $0x90] sm:$0xff]
  %v33 = vld [vmem:[%s0 + $0x98] sm:$0xff]
  %v34 = vld [vmem:[%s0 + $0xa0] sm:$0xff]
  %v35 = vld [vmem:[%s0 + $0xa8] sm:$0xff]
  %v36 = vld [vmem:[%s0 + $0xb0] sm:$0xff]
  %v37 = vld [vmem:[%s0 + $0xb8] sm:$0xff]
  %v38 = vld [vmem:[%s0 + $0xc0] sm:$0xff]
  %v39 = vld [vmem:[%s0 + $0xc8] sm:$0xff]
  %v40 = vld [vmem:[%s0 + $0xd0] sm:$0xff]
  %v41 = vld [vmem:[%s0 + $0xd8] sm:$0xff]
  %v42 = vld [vmem:[%s0 + $0xe0] sm:$0xff]
  %v43 = vld [vmem:[%s0 + $0xe8] sm:$0xff]
  %v44 = vld [vmem:[%s0 + $0xf0] sm:$0xff]
  %v45 = vld [vmem:[%s0 + $0xf8] sm:$0xff]
  %v46 = vld [vmem:[%s1] sm:$0xff]
  %v47 = vld [vmem:[%s1 + $0x8] sm:$0xff]
  %v48 = vld [vmem:[%s1 + $0x10] sm:$0xff]
  %v49 = vld [vmem:[%s1 + $0x18] sm:$0xff]
  %v50 = vld [vmem:[%s1 + $0x20] sm:$0xff]
  %v51 = vld [vmem:[%s1 + $0x28] sm:$0xff]
  %v52 = vld [vmem:[%s1 + $0x30] sm:$0xff]
  %v53 = vld [vmem:[%s1 + $0x38] sm:$0xff]
  %v54 = vld [vmem:[%s1 + $0x40] sm:$0xff]
  %v55 = vld [vmem:[%s1 + $0x48] sm:$0xff]
  %v56 = vld [vmem:[%s1 + $0x50] sm:$0xff]
  %v57 = vld [vmem:[%s1 + $0x58] sm:$0xff]
  %v58 = vld [vmem:[%s1 + $0x60] sm:$0xff]
  %v59 = vld [vmem:[%s1 + $0x68] sm:$0xff]
  %v60 = vld [vmem:[%s1 + $0x70] sm:$0xff]
  %v61 = vld [vmem:[%s1 + $0x78] sm:$0xff]
  %v62 = vld [vmem:[%s1 + $0x80] sm:$0xff]
  %v63 = vld [vmem:[%s1 + $0x88] sm:$0xff]
  %v64 = vld [vmem:[%s2] sm:$0x1]
  %v66 = vlaneseq
  %v67 = vshrl.u32 %v66, 7
  %v68 = vsub.s32 0, %v67
  %v69 = vrot.slane %v64, %v68
  %vm71 = vcmask 130048
  %v73 = vsel %vm71, %v15, 0
  %v76 = vsel %vm71, %v17, 0
  %v79 = vsel %vm71, %v19, 0
  %v82 = vsel %vm71, %v21, 0
  %v85 = vsel %vm71, %v23, 0
  %v88 = vsel %vm71, %v25, 0
  %v91 = vsel %vm71, %v27, 0
  %v94 = vsel %vm71, %v29, 0
  %v97 = vsel %vm71, %v31, 0
  %v100 = vsel %vm71, %v33, 0
  %v103 = vsel %vm71, %v35, 0
  %v106 = vsel %vm71, %v37, 0
  %v109 = vsel %vm71, %v39, 0
  %v112 = vsel %vm71, %v41, 0
  %v115 = vsel %vm71, %v43, 0
  %v118 = vsel %vm71, %v45, 0
  %120 = vmatprep.subr.mxu0 0.0
  %121 = vmatpush1.msra.mxu0 %v61
  %122 = vmatprep.subr.mxu0 0.0
  %123 = vmatpush1.msra.mxu0 %v60
  %124 = vmatprep.subr.mxu0 0.0
  %125 = vmatpush1.msra.mxu0 %v59
  %126 = vmatprep.subr.mxu0 0.0
  %127 = vmatpush1.msra.mxu0 %v58
  %128 = vmatprep.subr.mxu0 0.0
  %129 = vmatpush1.msra.mxu0 %v57
  %130 = vmatprep.subr.mxu0 0.0
  %131 = vmatpush1.msra.mxu0 %v56
  %132 = vmatprep.subr.mxu0 0.0
  %133 = vmatpush1.msra.mxu0 %v55
  %134 = vmatprep.subr.mxu0 0.0
  %135 = vmatpush1.msra.mxu0 %v54
  %136 = vmatprep.subr.mxu0 0.0
  %137 = vmatpush1.msra.mxu0 %v53
  %138 = vmatprep.subr.mxu0 0.0
  %139 = vmatpush1.msra.mxu0 %v52
  %140 = vmatprep.subr.mxu0 0.0
  %141 = vmatpush1.msra.mxu0 %v51
  %142 = vmatprep.subr.mxu0 0.0
  %143 = vmatpush1.msra.mxu0 %v50
  %144 = vmatprep.subr.mxu0 0.0
  %145 = vmatpush1.msra.mxu0 %v49
  %146 = vmatprep.subr.mxu0 0.0
  %147 = vmatpush1.msra.mxu0 %v48
  %148 = vmatprep.subr.mxu0 0.0
  %149 = vmatpush1.msra.mxu0 %v47
  %150 = vmatprep.subr.mxu0 0.0
  %151 = vmatpush1.msra.mxu0 %v46
  %152 = vmatprep.subr.mxu0 0.0
  %153 = vmatpush2.msra.mxu0 0.0
  %154 = vmatprep.subr.mxu0 0.0
  %155 = vmatpush2.msra.mxu0 0.0
  %156 = vmatprep.subr.mxu0 0.0
  %157 = vmatpush2.msra.mxu0 0.0
  %158 = vmatprep.subr.mxu0 0.0
  %159 = vmatpush2.msra.mxu0 0.0
  %160 = vmatprep.subr.mxu0 0.0
  %161 = vmatpush2.msra.mxu0 0.0
  %162 = vmatprep.subr.mxu0 0.0
  %163 = vmatpush2.msra.mxu0 0.0
  %164 = vmatprep.subr.mxu0 0.0
  %165 = vmatpush2.msra.mxu0 0.0
  %166 = vmatprep.subr.mxu0 0.0
  %167 = vmatpush2.msra.mxu0 0.0
  %168 = vmatprep.subr.mxu0 0.0
  %169 = vmatpush2.msra.mxu0 0.0
  %170 = vmatprep.subr.mxu0 0.0
  %171 = vmatpush2.msra.mxu0 0.0
  %172 = vmatprep.subr.mxu0 0.0
  %173 = vmatpush2.msra.mxu0 0.0
  %174 = vmatprep.subr.mxu0 0.0
  %175 = vmatpush2.msra.mxu0 0.0
  %176 = vmatprep.subr.mxu0 0.0
  %177 = vmatpush2.msra.mxu0 0.0
  %178 = vmatprep.subr.mxu0 0.0
  %179 = vmatpush2.msra.mxu0 0.0
  %180 = vmatprep.subr.mxu0 0.0
  %181 = vmatpush2.msra.mxu0 %v63
  %182 = vmatprep.subr.mxu0 0.0
  %183 = vmatpush2.msra.mxu0 %v62
  %184 = vmatprep.mubr.f32.mxu0 %v73
  %185 = vmatmul.mubr.f32.gmra.mxu0 %v14
  %v186 = vpop.f32.mrf.mxu0
  %v187 = vadd.f32 %v69, %v186
  %v188 = vpop.f32.mrf.mxu0
  %189 = vmatprep.mubr.f32.mxu0 %v76
  %190 = vmatmul.mubr.f32.gmra.mxu0 %v16
  %v191 = vpop.f32.mrf.mxu0
  %v192 = vadd.f32 %v69, %v191
  %v193 = vpop.f32.mrf.mxu0
  %194 = vmatprep.mubr.f32.mxu0 %v79
  %195 = vmatmul.mubr.f32.gmra.mxu0 %v18
  %v196 = vpop.f32.mrf.mxu0
  %v197 = vadd.f32 %v69, %v196
  %v198 = vpop.f32.mrf.mxu0
  %199 = vmatprep.mubr.f32.mxu0 %v82
  %200 = vmatmul.mubr.f32.gmra.mxu0 %v20
  %v201 = vpop.f32.mrf.mxu0
  %v202 = vadd.f32 %v69, %v201
  %v203 = vpop.f32.mrf.mxu0
  %204 = vmatprep.mubr.f32.mxu0 %v85
  %205 = vmatmul.mubr.f32.gmra.mxu0 %v22
  %v206 = vpop.f32.mrf.mxu0
  %v207 = vadd.f32 %v69, %v206
  %v208 = vpop.f32.mrf.mxu0
  %209 = vmatprep.mubr.f32.mxu0 %v88
  %210 = vmatmul.mubr.f32.gmra.mxu0 %v24
  %v211 = vpop.f32.mrf.mxu0
  %v212 = vadd.f32 %v69, %v211
  %v213 = vpop.f32.mrf.mxu0
  %214 = vmatprep.mubr.f32.mxu0 %v91
  %215 = vmatmul.mubr.f32.gmra.mxu0 %v26
  %v216 = vpop.f32.mrf.mxu0
  %v217 = vadd.f32 %v69, %v216
  %v218 = vpop.f32.mrf.mxu0
  %219 = vmatprep.mubr.f32.mxu0 %v94
  %220 = vmatmul.mubr.f32.gmra.mxu0 %v28
  %v221 = vpop.f32.mrf.mxu0
  %v222 = vadd.f32 %v69, %v221
  %v223 = vpop.f32.mrf.mxu0
  %224 = vmatprep.mubr.f32.mxu0 %v97
  %225 = vmatmul.mubr.f32.gmra.mxu0 %v30
  %v226 = vpop.f32.mrf.mxu0
  %v227 = vadd.f32 %v69, %v226
  %v228 = vpop.f32.mrf.mxu0
  %229 = vmatprep.mubr.f32.mxu0 %v100
  %230 = vmatmul.mubr.f32.gmra.mxu0 %v32
  %v231 = vpop.f32.mrf.mxu0
  %v232 = vadd.f32 %v69, %v231
  %v233 = vpop.f32.mrf.mxu0
  %234 = vmatprep.mubr.f32.mxu0 %v103
  %235 = vmatmul.mubr.f32.gmra.mxu0 %v34
  %v236 = vpop.f32.mrf.mxu0
  %v237 = vadd.f32 %v69, %v236
  %v238 = vpop.f32.mrf.mxu0
  %239 = vmatprep.mubr.f32.mxu0 %v106
  %240 = vmatmul.mubr.f32.gmra.mxu0 %v36
  %v241 = vpop.f32.mrf.mxu0
  %v242 = vadd.f32 %v69, %v241
  %v243 = vpop.f32.mrf.mxu0
  %244 = vmatprep.mubr.f32.mxu0 %v109
  %245 = vmatmul.mubr.f32.gmra.mxu0 %v38
  %v246 = vpop.f32.mrf.mxu0
  %v247 = vadd.f32 %v69, %v246
  %v248 = vpop.f32.mrf.mxu0
  %249 = vmatprep.mubr.f32.mxu0 %v112
  %250 = vmatmul.mubr.f32.gmra.mxu0 %v40
  %v251 = vpop.f32.mrf.mxu0
  %v252 = vadd.f32 %v69, %v251
  %v253 = vpop.f32.mrf.mxu0
  %254 = vmatprep.mubr.f32.mxu0 %v115
  %255 = vmatmul.mubr.f32.gmra.mxu0 %v42
  %v256 = vpop.f32.mrf.mxu0
  %v257 = vadd.f32 %v69, %v256
  %v258 = vpop.f32.mrf.mxu0
  %259 = vmatprep.mubr.f32.mxu0 %v118
  %260 = vmatmul.mubr.f32.gmra.mxu0 %v44
  %v261 = vpop.f32.mrf.mxu0
  %v262 = vadd.f32 %v69, %v261
  %v263 = vpop.f32.mrf.mxu0
  %264 = vdwg.mxu0
  %v265 = vmax.f32 %v187, 0.0
  %v266 = vmax.f32 %v192, 0.0
  %v267 = vmax.f32 %v197, 0.0
  %v268 = vmax.f32 %v202, 0.0
  %v269 = vmax.f32 %v207, 0.0
  %v270 = vmax.f32 %v212, 0.0
  %v271 = vmax.f32 %v217, 0.0
  %v272 = vmax.f32 %v222, 0.0
  %v273 = vmax.f32 %v227, 0.0
  %v274 = vmax.f32 %v232, 0.0
  %v275 = vmax.f32 %v237, 0.0
  %v276 = vmax.f32 %v242, 0.0
  %v277 = vmax.f32 %v247, 0.0
  %v278 = vmax.f32 %v252, 0.0
  %v279 = vmax.f32 %v257, 0.0
  %v280 = vmax.f32 %v262, 0.0
  %281 = vst [vmem:[%s3] sm:$0xff] %v265
  %282 = vst [vmem:[%s3 + $0x8] sm:$0xff] %v266
  %283 = vst [vmem:[%s3 + $0x10] sm:$0xff] %v267
  %284 = vst [vmem:[%s3 + $0x18] sm:$0xff] %v268
  %285 = vst [vmem:[%s3 + $0x20] sm:$0xff] %v269
  %286 = vst [vmem:[%s3 + $0x28] sm:$0xff] %v270
  %287 = vst [vmem:[%s3 + $0x30] sm:$0xff] %v271
  %288 = vst [vmem:[%s3 + $0x38] sm:$0xff] %v272
  %289 = vst [vmem:[%s3 + $0x40] sm:$0xff] %v273
  %290 = vst [vmem:[%s3 + $0x48] sm:$0xff] %v274
  %291 = vst [vmem:[%s3 + $0x50] sm:$0xff] %v275
  %292 = vst [vmem:[%s3 + $0x58] sm:$0xff] %v276
  %293 = vst [vmem:[%s3 + $0x60] sm:$0xff] %v277
  %294 = vst [vmem:[%s3 + $0x68] sm:$0xff] %v278
  %295 = vst [vmem:[%s3 + $0x70] sm:$0xff] %v279
  %296 = vst [vmem:[%s3 + $0x78] sm:$0xff] %v280
  // Predicated region
  $region14: #{autoencoder_forward.8} parent=0 // pred_check
    _
  $region15: #{autoencoder_forward.8} parent=0 // pred_check_branch
    %298 = sbr.rel (0) target = $region17
  $region16: #{autoencoder_forward.8} parent=0 // pred_region
    _
  $region17: #{autoencoder_forward.8} parent=0 // pred_fallthru
    _
  // Predicated region
  $region18: #{autoencoder_forward.8} parent=0 // pred_check
    _
  $region19: #{autoencoder_forward.8} parent=0 // pred_check_branch
    %300 = sbr.rel (0) target = $region21
  $region20: #{autoencoder_forward.8} parent=0 // pred_region
    _
  $region21: #{autoencoder_forward.8} parent=0 // pred_fallthru
    _

// kernel: autoencoder_forward.9
$region0: #{autoencoder_forward.9}
  #allocation0 [shape = 'u32[]', space=smem, size = 0x4, offset = 0x4, fixed_abs, tag = 'smem constant byte address 0x4 - core index']
  #allocation1 [shape = 'u32[144,128]{1,0:T(1,128)}', space=vmem, size = 0x12000, scoped, tag = 'internal scratch']
  %s0 = inlined_call_operand.vmem [shape: f32[640,72], index: 0, kind: input, shape index: {}]
  %s1 = inlined_call_operand.vmem [shape: f32[72,128], index: 1, kind: input, shape index: {}]
  %s2 = inlined_call_operand.vmem [shape: f32[1,128], index: 2, kind: input, shape index: {}]
  %s3 = inlined_call_operand.vmem [shape: f32[640,128], index: 3, kind: output, shape index: {}]
  %s4 = sld [smem:[#allocation0]]
  $region45: #{autoencoder_forward.9} parent=0
    _
  %s6 = ssub.s32 1, %s4
  %s7 = scalar_select 0, %s6, %s4
  loop: start=0, step=1, limit=7
  $region2: #{autoencoder_forward.9} parent=0 // loop_pre_header
    _
  $region3: #{autoencoder_forward.9} parent=0 // loop_header
    %s9 = sphi 0, %s13
    %p10 = scmp.ge.s32.totalorder %s9, 7
    %s19 = sphi 0, %s21
    %s22 = sphi 0, %s19
    %s23 = sphi 0, %s22
    %s39 = sphi 0, %s23
    %s43 = sphi 0, %s43
    %s45 = sphi 0, %s43
    %s46 = sphi 0, %s45
    %s60 = sphi 0, %s46
    %s64 = sphi 0, %s64
    %s66 = sphi 0, %s64
    %s67 = sphi 0, %s66
    %s81 = sphi 0, %s67
    %s87 = sphi 0, %s89
    %s90 = sphi 0, %s87
    %s91 = sphi 0, %s90
    %s107 = sphi 0, %s91
  $region4: #{autoencoder_forward.9} parent=0 // loop_header_branch
    %12 = sbr.rel (%p10) target = $region8
  $region5: #{autoencoder_forward.9} parent=0 // loop_body
    %s14 = ssub.s32 %s9, 1
    %s15 = ssub.s32 %s9, 2
    %s16 = sadd.s32 %s9, 1
    %s17 = ssub.s32 %s9, %s16
    %p18 = scmp.eq.s32.totalorder %s17, 0
    %s20 = sadd.s32 %s19, 1
    %s21 = scalar_select %p18, %s19, %s20
    %p24 = pneg %p18
    %p25 = scmp.eq.s32.totalorder %s9, 4
    %p26 = por %p24, %p25
    %p27 = scmp.ne.s32.totalorder %s19, %s22
    %p28 = scmp.eq.s32.totalorder %s9, 0
    %p29 = por %p27, %p28
    %p30 = scmp.ne.s32.totalorder %s19, %s22
    %p31 = scmp.eq.s32.totalorder %s14, 4
    %p32 = por %p30, %p31
    %p33 = scmp.ne.s32.totalorder %s22, %s23
    %p34 = scmp.eq.s32.totalorder %s14, 0
    %p35 = por %p33, %p34
    %p36 = scmp.ne.s32.totalorder %s22, %s23
    %p37 = scmp.eq.s32.totalorder %s15, 4
    %p38 = por %p36, %p37
    %p40 = scmp.ne.s32.totalorder %s23, %s39
    %p41 = scmp.eq.s32.totalorder %s15, 0
    %p42 = por %p40, %p41
    %s44 = sadd.s32 %s43, 1
    %p47 = scmp.eq.s32.totalorder %s9, 4
    %p48 = scmp.ne.s32.totalorder %s43, %s45
    %p49 = scmp.eq.s32.totalorder %s9, 0
    %p50 = por %p48, %p49
    %p51 = scmp.ne.s32.totalorder %s43, %s45
    %p52 = scmp.eq.s32.totalorder %s14, 4
    %p53 = por %p51, %p52
    %p54 = scmp.ne.s32.totalorder %s45, %s46
    %p55 = scmp.eq.s32.totalorder %s14, 0
    %p56 = por %p54, %p55
    %p57 = scmp.ne.s32.totalorder %s45, %s46
    %p58 = scmp.eq.s32.totalorder %s15, 4
    %p59 = por %p57, %p58
    %p61 = scmp.ne.s32.totalorder %s46, %s60
    %p62 = scmp.eq.s32.totalorder %s15, 0
    %p63 = por %p61, %p62
    %s65 = sadd.s32 %s64, 1
    %p68 = scmp.eq.s32.totalorder %s9, 4
    %p69 = scmp.ne.s32.totalorder %s64, %s66
    %p70 = scmp.eq.s32.totalorder %s9, 0
    %p71 = por %p69, %p70
    %p72 = scmp.ne.s32.totalorder %s64, %s66
    %p73 = scmp.eq.s32.totalorder %s14, 4
    %p74 = por %p72, %p73
    %p75 = scmp.ne.s32.totalorder %s66, %s67
    %p76 = scmp.eq.s32.totalorder %s14, 0
    %p77 = por %p75, %p76
    %p78 = scmp.ne.s32.totalorder %s66, %s67
    %p79 = scmp.eq.s32.totalorder %s15, 4
    %p80 = por %p78, %p79
    %p82 = scmp.ne.s32.totalorder %s67, %s81
    %p83 = scmp.eq.s32.totalorder %s15, 0
    %p84 = por %p82, %p83
    %s85 = ssub.s32 %s9, %s16
    %p86 = scmp.eq.s32.totalorder %s85, 0
    %s88 = sadd.s32 %s87, 1
    %s89 = scalar_select %p86, %s87, %s88
    %p92 = pneg %p86
    %p93 = scmp.eq.s32.totalorder %s9, 4
    %p94 = por %p92, %p93
    %p95 = scmp.ne.s32.totalorder %s87, %s90
    %p96 = scmp.eq.s32.totalorder %s9, 0
    %p97 = por %p95, %p96
    %p98 = scmp.ne.s32.totalorder %s87, %s90
    %p99 = scmp.eq.s32.totalorder %s14, 4
    %p100 = por %p98, %p99
    %p101 = scmp.ne.s32.totalorder %s90, %s91
    %p102 = scmp.eq.s32.totalorder %s14, 0
    %p103 = por %p101, %p102
    %p104 = scmp.ne.s32.totalorder %s90, %s91
    %p105 = scmp.eq.s32.totalorder %s15, 4
    %p106 = por %p104, %p105
    %p108 = scmp.ne.s32.totalorder %s91, %s107
    %p109 = scmp.eq.s32.totalorder %s15, 0
    %p110 = por %p108, %p109
    %p111 = scmp.le.s32.totalorder 1, %s9
    %p112 = scmp.lt.s32.totalorder %s9, 6
    %p113 = pnand %p111, %p112
    %p114 = pneg %p113
    // Predicated region
    $region9: #{autoencoder_forward.9} parent=5 // pred_check
      _
    $region10: #{autoencoder_forward.9} parent=5 // pred_check_branch
      %116 = sbr.rel (%p113) target = $region12
    $region11: #{autoencoder_forward.9} parent=5 // pred_region
      %s117 = ssub.s32 %s9, 1
      // Predicated region
      $region13: #{autoencoder_forward.9} parent=11 // pred_check
        %p118 = pneg %p56
      $region14: #{autoencoder_forward.9} parent=11 // pred_check_branch
        %120 = sbr.rel (%p118) target = $region16
      $region15: #{autoencoder_forward.9} parent=11 // pred_region
        _
      $region16: #{autoencoder_forward.9} parent=11 // pred_fallthru
        _
      // Predicated region
      $region17: #{autoencoder_forward.9} parent=11 // pred_check
        %p121 = pneg %p77
      $region18: #{autoencoder_forward.9} parent=11 // pred_check_branch
        %123 = sbr.rel (%p121) target = $region20
      $region19: #{autoencoder_forward.9} parent=11 // pred_region
        _
      $region20: #{autoencoder_forward.9} parent=11 // pred_fallthru
        _
    $region12: #{autoencoder_forward.9} parent=5 // pred_fallthru
      _
    %p124 = scmp.lt.s32.totalorder %s9, 5
    // Predicated region
    $region21: #{autoencoder_forward.9} parent=5 // pred_check
      %p125 = pneg %p124
    $region22: #{autoencoder_forward.9} parent=5 // pred_check_branch
      %127 = sbr.rel (%p125) target = $region24
    $region23: #{autoencoder_forward.9} parent=5 // pred_region
      // Predicated region
      $region25: #{autoencoder_forward.9} parent=23 // pred_check
        %p128 = pneg %p29
      $region26: #{autoencoder_forward.9} parent=23 // pred_check_branch
        %130 = sbr.rel (%p128) target = $region28
      $region27: #{autoencoder_forward.9} parent=23 // pred_region
        %s131 = smul.u32 16, %s9
        %p132 = scmp.lt.s32.totalorder %s131, 79
        %s133 = scalar_select %p132, %s131, 79
        %s134 = smul.addr %s133, 8
        %s135 = scalar_lea.vmem %s0, %s134
        %s136 = smul.u32 16, %s9
      $region28: #{autoencoder_forward.9} parent=23 // pred_fallthru
        _
    $region24: #{autoencoder_forward.9} parent=5 // pred_fallthru
      _
    %p137 = scmp.le.s32.totalorder 1, %s9
    %p138 = scmp.lt.s32.totalorder %s9, 6
    %p139 = pnand %p137, %p138
    %p140 = pneg %p139
    // Predicated region
    $region29: #{autoencoder_forward.9} parent=5 // pred_check
      _
    $region30: #{autoencoder_forward.9} parent=5 // pred_check_branch
      %142 = sbr.rel (%p139) target = $region32
    $region31: #{autoencoder_forward.9} parent=5 // pred_region
      %s143 = ssub.s32 %s9, 1
      %s144 = smul.u32 16, %s14
      %p145 = scmp.lt.s32.totalorder %s144, 79
      %s146 = scalar_select %p145, %s144, 79
      %s147 = smul.addr %s146, 8
      %s148 = scalar_lea.vmem %s0, %s147
      %p149 = pneg %p35
      %p150 = pneg %p32
      %p151 = pneg %p56
      %p152 = pneg %p53
      %p153 = pneg %p77
      %p154 = pneg %p74
      %p155 = pneg %p103
      %p156 = pneg %p100
      %s157 = smul.u32 16, %s14
      %p158 = scmp.lt.s32.totalorder %s157, 79
      %s159 = scalar_select %p158, %s157, 79
      %s160 = smul.addr %s159, 8
      %s161 = scalar_lea.vmem %s3, %s160
      %s162 = smul.u32 16, %s14
      %p163 = scmp.lt.s32.totalorder %s162, 79
      %s164 = scalar_select %p163, %s162, 79
      %s165 = smul.addr %s164, 8
      %s166 = scalar_lea.vmem %s0, %s165
      %s167 = smul.u32 16, %s14
      %s168 = smul.u32 16, %s14
      %p169 = scmp.lt.s32.totalorder %s168, 79
      %s170 = scalar_select %p169, %s168, 79
      %s171 = smul.addr %s170, 8
      %s172 = scalar_lea.vmem %s3, %s171
      %s173 = smul.u32 16, %s14
      %v174 = vld [vmem:[%s166] sm:$0xff]
      %v175 = vld [vmem:[%s166 + $0x8] sm:$0xff]
      %v176 = vld [vmem:[%s166 + $0x10] sm:$0xff]
      %v177 = vld [vmem:[%s166 + $0x18] sm:$0xff]
      %v178 = vld [vmem:[%s166 + $0x20] sm:$0xff]
      %v179 = vld [vmem:[%s166 + $0x28] sm:$0xff]
      %v180 = vld [vmem:[%s166 + $0x30] sm:$0xff]
      %v181 = vld [vmem:[%s166 + $0x38] sm:$0xff]
      %v182 = vld [vmem:[%s166 + $0x40] sm:$0xff]
      %v183 = vld [vmem:[%s166 + $0x48] sm:$0xff]
      %v184 = vld [vmem:[%s166 + $0x50] sm:$0xff]
      %v185 = vld [vmem:[%s166 + $0x58] sm:$0xff]
      %v186 = vld [vmem:[%s166 + $0x60] sm:$0xff]
      %v187 = vld [vmem:[%s166 + $0x68] sm:$0xff]
      %v188 = vld [vmem:[%s166 + $0x70] sm:$0xff]
      %v189 = vld [vmem:[%s166 + $0x78] sm:$0xff]
      %v190 = vld [vmem:[%s1] sm:$0xff]
      %v191 = vld [vmem:[%s1 + $0x8] sm:$0xff]
      %v192 = vld [vmem:[%s1 + $0x10] sm:$0xff]
      %v193 = vld [vmem:[%s1 + $0x18] sm:$0xff]
      %v194 = vld [vmem:[%s1 + $0x20] sm:$0xff]
      %v195 = vld [vmem:[%s1 + $0x28] sm:$0xff]
      %v196 = vld [vmem:[%s1 + $0x30] sm:$0xff]
      %v197 = vld [vmem:[%s1 + $0x38] sm:$0xff]
      %v198 = vld [vmem:[%s1 + $0x40] sm:$0xff]
      %v199 = vld [vmem:[%s2] sm:$0x1]
      %v201 = vlaneseq
      %v202 = vshrl.u32 %v201, 7
      %v203 = vsub.s32 0, %v202
      %v204 = vrot.slane %v199, %v203
      %vm206 = vcmask 588800
      %v208 = vsel %vm206, %v174, 0
      %v211 = vsel %vm206, %v175, 0
      %v214 = vsel %vm206, %v176, 0
      %v217 = vsel %vm206, %v177, 0
      %v220 = vsel %vm206, %v178, 0
      %v223 = vsel %vm206, %v179, 0
      %v226 = vsel %vm206, %v180, 0
      %v229 = vsel %vm206, %v181, 0
      %v232 = vsel %vm206, %v182, 0
      %v235 = vsel %vm206, %v183, 0
      %v238 = vsel %vm206, %v184, 0
      %v241 = vsel %vm206, %v185, 0
      %v244 = vsel %vm206, %v186, 0
      %v247 = vsel %vm206, %v187, 0
      %v250 = vsel %vm206, %v188, 0
      %v253 = vsel %vm206, %v189, 0
      %255 = vmatprep.subr.mxu0 0.0
      %256 = vmatpush1.msra.mxu0 0.0
      %257 = vmatprep.subr.mxu0 0.0
      %258 = vmatpush1.msra.mxu0 0.0
      %259 = vmatprep.subr.mxu0 0.0
      %260 = vmatpush1.msra.mxu0 0.0
      %261 = vmatprep.subr.mxu0 0.0
      %262 = vmatpush1.msra.mxu0 0.0
      %263 = vmatprep.subr.mxu0 0.0
      %264 = vmatpush1.msra.mxu0 0.0
      %265 = vmatprep.subr.mxu0 0.0
      %266 = vmatpush1.msra.mxu0 0.0
      %267 = vmatprep.subr.mxu0 0.0
      %268 = vmatpush1.msra.mxu0 0.0
      %269 = vmatprep.subr.mxu0 0.0
      %270 = vmatpush1.msra.mxu0 %v198
      %271 = vmatprep.subr.mxu0 0.0
      %272 = vmatpush1.msra.mxu0 %v197
      %273 = vmatprep.subr.mxu0 0.0
      %274 = vmatpush1.msra.mxu0 %v196
      %275 = vmatprep.subr.mxu0 0.0
      %276 = vmatpush1.msra.mxu0 %v195
      %277 = vmatprep.subr.mxu0 0.0
      %278 = vmatpush1.msra.mxu0 %v194
      %279 = vmatprep.subr.mxu0 0.0
      %280 = vmatpush1.msra.mxu0 %v193
      %281 = vmatprep.subr.mxu0 0.0
      %282 = vmatpush1.msra.mxu0 %v192
      %283 = vmatprep.subr.mxu0 0.0
      %284 = vmatpush1.msra.mxu0 %v191
      %285 = vmatprep.subr.mxu0 0.0
      %286 = vmatpush1.msra.mxu0 %v190
      %287 = vmatprep.subr.mxu0 0.0
      %288 = vmatpush2.msra.mxu0 0.0
      %289 = vmatprep.subr.mxu0 0.0
      %290 = vmatpush2.msra.mxu0 0.0
      %291 = vmatprep.subr.mxu0 0.0
      %292 = vmatpush2.msra.mxu0 0.0
      %293 = vmatprep.subr.mxu0 0.0
      %294 = vmatpush2.msra.mxu0 0.0
      %295 = vmatprep.subr.mxu0 0.0
      %296 = vmatpush2.msra.mxu0 0.0
      %297 = vmatprep.subr.mxu0 0.0
      %298 = vmatpush2.msra.mxu0 0.0
      %299 = vmatprep.subr.mxu0 0.0
      %300 = vmatpush2.msra.mxu0 0.0
      %301 = vmatprep.subr.mxu0 0.0
      %302 = vmatpush2.msra.mxu0 0.0
      %303 = vmatprep.subr.mxu0 0.0
      %304 = vmatpush2.msra.mxu0 0.0
      %305 = vmatprep.subr.mxu0 0.0
      %306 = vmatpush2.msra.mxu0 0.0
      %307 = vmatprep.subr.mxu0 0.0
      %308 = vmatpush2.msra.mxu0 0.0
      %309 = vmatprep.subr.mxu0 0.0
      %310 = vmatpush2.msra.mxu0 0.0
      %311 = vmatprep.subr.mxu0 0.0
      %312 = vmatpush2.msra.mxu0 0.0
      %313 = vmatprep.subr.mxu0 0.0
      %314 = vmatpush2.msra.mxu0 0.0
      %315 = vmatprep.subr.mxu0 0.0
      %316 = vmatpush2.msra.mxu0 0.0
      %317 = vmatprep.subr.mxu0 0.0
      %318 = vmatpush2.msra.mxu0 0.0
      %319 = vmatprep.mubr.f32.mxu0 0.0
      %320 = vmatmul.mubr.f32.gmra.mxu0 %v208
      %v321 = vpop.f32.mrf.mxu0
      %v322 = vadd.f32 %v204, %v321
      %v323 = vpop.f32.mrf.mxu0
      %324 = vmatprep.mubr.f32.mxu0 0.0
      %325 = vmatmul.mubr.f32.gmra.mxu0 %v211
      %v326 = vpop.f32.mrf.mxu0
      %v327 = vadd.f32 %v204, %v326
      %v328 = vpop.f32.mrf.mxu0
      %329 = vmatprep.mubr.f32.mxu0 0.0
      %330 = vmatmul.mubr.f32.gmra.mxu0 %v214
      %v331 = vpop.f32.mrf.mxu0
      %v332 = vadd.f32 %v204, %v331
      %v333 = vpop.f32.mrf.mxu0
      %334 = vmatprep.mubr.f32.mxu0 0.0
      %335 = vmatmul.mubr.f32.gmra.mxu0 %v217
      %v336 = vpop.f32.mrf.mxu0
      %v337 = vadd.f32 %v204, %v336
      %v338 = vpop.f32.mrf.mxu0
      %339 = vmatprep.mubr.f32.mxu0 0.0
      %340 = vmatmul.mubr.f32.gmra.mxu0 %v220
      %v341 = vpop.f32.mrf.mxu0
      %v342 = vadd.f32 %v204, %v341
      %v343 = vpop.f32.mrf.mxu0
      %344 = vmatprep.mubr.f32.mxu0 0.0
      %345 = vmatmul.mubr.f32.gmra.mxu0 %v223
      %v346 = vpop.f32.mrf.mxu0
      %v347 = vadd.f32 %v204, %v346
      %v348 = vpop.f32.mrf.mxu0
      %349 = vmatprep.mubr.f32.mxu0 0.0
      %350 = vmatmul.mubr.f32.gmra.mxu0 %v226
      %v351 = vpop.f32.mrf.mxu0
      %v352 = vadd.f32 %v204, %v351
      %v353 = vpop.f32.mrf.mxu0
      %354 = vmatprep.mubr.f32.mxu0 0.0
      %355 = vmatmul.mubr.f32.gmra.mxu0 %v229
      %v356 = vpop.f32.mrf.mxu0
      %v357 = vadd.f32 %v204, %v356
      %v358 = vpop.f32.mrf.mxu0
      %359 = vmatprep.mubr.f32.mxu0 0.0
      %360 = vmatmul.mubr.f32.gmra.mxu0 %v232
      %v361 = vpop.f32.mrf.mxu0
      %v362 = vadd.f32 %v204, %v361
      %v363 = vpop.f32.mrf.mxu0
      %364 = vmatprep.mubr.f32.mxu0 0.0
      %365 = vmatmul.mubr.f32.gmra.mxu0 %v235
      %v366 = vpop.f32.mrf.mxu0
      %v367 = vadd.f32 %v204, %v366
      %v368 = vpop.f32.mrf.mxu0
      %369 = vmatprep.mubr.f32.mxu0 0.0
      %370 = vmatmul.mubr.f32.gmra.mxu0 %v238
      %v371 = vpop.f32.mrf.mxu0
      %v372 = vadd.f32 %v204, %v371
      %v373 = vpop.f32.mrf.mxu0
      %374 = vmatprep.mubr.f32.mxu0 0.0
      %375 = vmatmul.mubr.f32.gmra.mxu0 %v241
      %v376 = vpop.f32.mrf.mxu0
      %v377 = vadd.f32 %v204, %v376
      %v378 = vpop.f32.mrf.mxu0
      %379 = vmatprep.mubr.f32.mxu0 0.0
      %380 = vmatmul.mubr.f32.gmra.mxu0 %v244
      %v381 = vpop.f32.mrf.mxu0
      %v382 = vadd.f32 %v204, %v381
      %v383 = vpop.f32.mrf.mxu0
      %384 = vmatprep.mubr.f32.mxu0 0.0
      %385 = vmatmul.mubr.f32.gmra.mxu0 %v247
      %v386 = vpop.f32.mrf.mxu0
      %v387 = vadd.f32 %v204, %v386
      %v388 = vpop.f32.mrf.mxu0
      %389 = vmatprep.mubr.f32.mxu0 0.0
      %390 = vmatmul.mubr.f32.gmra.mxu0 %v250
      %v391 = vpop.f32.mrf.mxu0
      %v392 = vadd.f32 %v204, %v391
      %v393 = vpop.f32.mrf.mxu0
      %394 = vmatprep.mubr.f32.mxu0 0.0
      %395 = vmatmul.mubr.f32.gmra.mxu0 %v253
      %v396 = vpop.f32.mrf.mxu0
      %v397 = vadd.f32 %v204, %v396
      %v398 = vpop.f32.mrf.mxu0
      %399 = vdwg.mxu0
      %v400 = vtanh.pop %v322
      %v401 = vtanh.pop %v327
      %v402 = vtanh.pop %v332
      %v403 = vtanh.pop %v337
      %v404 = vtanh.pop %v342
      %v405 = vtanh.pop %v347
      %v406 = vtanh.pop %v352
      %v407 = vtanh.pop %v357
      %v408 = vtanh.pop %v362
      %v409 = vtanh.pop %v367
      %v410 = vtanh.pop %v372
      %v411 = vtanh.pop %v377
      %v412 = vtanh.pop %v382
      %v413 = vtanh.pop %v387
      %v414 = vtanh.pop %v392
      %v415 = vtanh.pop %v397
      %416 = vst [vmem:[%s172] sm:$0xff] %v400
      %417 = vst [vmem:[%s172 + $0x8] sm:$0xff] %v401
      %418 = vst [vmem:[%s172 + $0x10] sm:$0xff] %v402
      %419 = vst [vmem:[%s172 + $0x18] sm:$0xff] %v403
      %420 = vst [vmem:[%s172 + $0x20] sm:$0xff] %v404
      %421 = vst [vmem:[%s172 + $0x28] sm:$0xff] %v405
      %422 = vst [vmem:[%s172 + $0x30] sm:$0xff] %v406
      %423 = vst [vmem:[%s172 + $0x38] sm:$0xff] %v407
      %424 = vst [vmem:[%s172 + $0x40] sm:$0xff] %v408
      %425 = vst [vmem:[%s172 + $0x48] sm:$0xff] %v409
      %426 = vst [vmem:[%s172 + $0x50] sm:$0xff] %v410
      %427 = vst [vmem:[%s172 + $0x58] sm:$0xff] %v411
      %428 = vst [vmem:[%s172 + $0x60] sm:$0xff] %v412
      %429 = vst [vmem:[%s172 + $0x68] sm:$0xff] %v413
      %430 = vst [vmem:[%s172 + $0x70] sm:$0xff] %v414
      %431 = vst [vmem:[%s172 + $0x78] sm:$0xff] %v415
      %s432 = smul.u32 16, %s14
      %p433 = scmp.lt.s32.totalorder %s432, 79
      %s434 = scalar_select %p433, %s432, 79
      %s435 = smul.addr %s434, 8
      %s436 = scalar_lea.vmem %s3, %s435
      // Predicated region
      $region33: #{autoencoder_forward.9} parent=31 // pred_check
        %p437 = pneg %p100
      $region34: #{autoencoder_forward.9} parent=31 // pred_check_branch
        %439 = sbr.rel (%p437) target = $region36
      $region35: #{autoencoder_forward.9} parent=31 // pred_region
        %s440 = smul.u32 16, %s14
      $region36: #{autoencoder_forward.9} parent=31 // pred_fallthru
        _
    $region32: #{autoencoder_forward.9} parent=5 // pred_fallthru
      _
    %p441 = scmp.le.s32.totalorder 2, %s9
    // Predicated region
    $region37: #{autoencoder_forward.9} parent=5 // pred_check
      %p442 = pneg %p441
    $region38: #{autoencoder_forward.9} parent=5 // pred_check_branch
      %444 = sbr.rel (%p442) target = $region40
    $region39: #{autoencoder_forward.9} parent=5 // pred_region
      %s445 = ssub.s32 %s9, 2
      // Predicated region
      $region41: #{autoencoder_forward.9} parent=39 // pred_check
        %p446 = pneg %p106
      $region42: #{autoencoder_forward.9} parent=39 // pred_check_branch
        %448 = sbr.rel (%p446) target = $region44
      $region43: #{autoencoder_forward.9} parent=39 // pred_region
        %s449 = smul.u32 16, %s15
        %p450 = scmp.lt.s32.totalorder %s449, 79
        %s451 = scalar_select %p450, %s449, 79
        %s452 = smul.addr %s451, 8
        %s453 = scalar_lea.vmem %s3, %s452
      $region44: #{autoencoder_forward.9} parent=39 // pred_fallthru
        _
    $region40: #{autoencoder_forward.9} parent=5 // pred_fallthru
      _
  $region6: #{autoencoder_forward.9} parent=0 // loop_footer
    %s13 = sadd.s32 1, %s9
  $region7: #{autoencoder_forward.9} parent=0 // loop_footer_branch
    %8 = sbr.rel target = $region3
  $region8: #{autoencoder_forward.9} parent=0 // loop_exit
    _

</llo_original>
